<compile_context>
chip_gen: v6e
topology: v6e:2x2x1
jax: 0.10.0
libtpu: 0.0.40
codegen_flags: <defaults>
</compile_context>

<pallas_src>
import jax
import jax.numpy as jnp
from jax.experimental import pallas as pl
from jax.experimental.pallas import tpu as pltpu

NEG_SLOPE = 0.01            # torch.nn.functional.leaky_relu default

H1, H2 = 400, 300           # logical hidden sizes from the PyTorch module
K_PAD = 256                 # fused padded input: [s | 1 | 0...](128 lanes) ++ [a | 1 | 0...](128 lanes)
H1_PAD = 512                # 400 -> 512
H2_PAD = 384                # 300 -> 384
OUT_PAD = 128               # lane-dense output block; only column 0 carries q
A_OFFSET = 128              # where the action sub-slot starts inside the fused input


def _leaky_relu(x):
    return jnp.where(x > 0, x, NEG_SLOPE * x)


def _round_up(x, m):
    return (x + m - 1) // m * m


# ----------------------------------------------------------------------------- kernel


def critic_kernel(x_ref, w1_ref, w2s_ref, w2a_ref, w3_ref, b3_ref, q_ref):
    x = x_ref[...]                                               # (TB, 256)  [s|1|0.. , a|1|0..]

    # Stage 1: leaky_relu([s|1] @ [W1; b1]) -> (TB, 512); padded lanes (400..511) stay exactly 0.
    s1 = _leaky_relu(jnp.dot(x, w1_ref[...], preferred_element_type=jnp.float32))

    # Stage 2: state branch (K=512) + action branch (K=256, b2a folded via the ones lane).
    h = _leaky_relu(
        jnp.dot(s1, w2s_ref[...], preferred_element_type=jnp.float32)
        + jnp.dot(x, w2a_ref[...], preferred_element_type=jnp.float32))   # (TB, 384)

    # Stage 3: lane-dense (TB, 128) output; only column 0 is the Q-value.
    q = jnp.dot(h, w3_ref[...], preferred_element_type=jnp.float32) + b3_ref[...]
    q_ref[...] = q.astype(q_ref.dtype)


# ----------------------------------------------------------------------------- wrapper


def prepare_critic_params(params, state_dim, action_dim):
    """One-time fusion/padding of the weights into MXU/lane-friendly matrices (f32)."""
    assert state_dim + 1 <= A_OFFSET, "state_dim must fit (with ones lane) in 128 lanes"
    assert action_dim + 1 <= K_PAD - A_OFFSET, "action_dim must fit (with ones lane) in 128 lanes"

    w1p = jnp.zeros((K_PAD, H1_PAD), jnp.float32)
    w1p = w1p.at[:state_dim, :H1].set(params["w1"])
    w1p = w1p.at[state_dim, :H1].set(params["b1"][0])            # b1 folded via the s-ones lane

    w2sp = jnp.zeros((H1_PAD, H2_PAD), jnp.float32)
    w2sp = w2sp.at[:H1, :H2].set(params["w2s"])                  # layer_2_s bias unused in forward

    w2ap = jnp.zeros((K_PAD, H2_PAD), jnp.float32)
    w2ap = w2ap.at[A_OFFSET:A_OFFSET + action_dim, :H2].set(params["w2a"])
    w2ap = w2ap.at[A_OFFSET + action_dim, :H2].set(params["b2a"][0])  # b2a folded via the a-ones lane

    w3p = jnp.zeros((H2_PAD, OUT_PAD), jnp.float32)
    w3p = w3p.at[:H2, 0].set(params["w3"][:, 0])

    b3p = jnp.zeros((1, OUT_PAD), jnp.float32)
    b3p = b3p.at[0, 0].set(params["b3"][0, 0])

    return {"w1p": w1p, "w2sp": w2sp, "w2ap": w2ap, "w3p": w3p, "b3p": b3p}


def critic_forward(s, a, prep):
    """s: (B, state_dim), a: (B, action_dim) -> q: (B, 1)."""
    B, state_dim = s.shape
    action_dim = a.shape[1]

    # Batch tile: multiple of 8 sublanes, capped at 256 rows per grid step.
    tb = min(256, _round_up(B, 8))
    b_pad = _round_up(B, tb)

    # Fused, padded activation input: [s | 1 | 0...] in lanes 0..127, [a | 1 | 0...] in 128..255.
    x = jnp.zeros((b_pad, K_PAD), jnp.float32)
    x = x.at[:B, :state_dim].set(s.astype(jnp.float32))
    x = x.at[:B, state_dim].set(1.0)
    x = x.at[:B, A_OFFSET:A_OFFSET + action_dim].set(a.astype(jnp.float32))
    x = x.at[:B, A_OFFSET + action_dim].set(1.0)

    grid = (b_pad // tb,)
    resident = lambda i: (0, 0)   # weights: constant block index -> DMA once, stay in VMEM

    grid_spec = pltpu.PrefetchScalarGridSpec(
        num_scalar_prefetch=0,
        grid=grid,
        in_specs=[
            pl.BlockSpec((tb, K_PAD), lambda i: (i, 0)),         # x (batch-tiled, double-buffered)
            pl.BlockSpec((K_PAD, H1_PAD), resident),             # W1 (+b1 folded)
            pl.BlockSpec((H1_PAD, H2_PAD), resident),            # W2s
            pl.BlockSpec((K_PAD, H2_PAD), resident),             # W2a (+b2a folded)
            pl.BlockSpec((H2_PAD, OUT_PAD), resident),           # W3 (lane-padded)
            pl.BlockSpec((1, OUT_PAD), resident),                # b3 (lane-padded)
        ],
        out_specs=pl.BlockSpec((tb, OUT_PAD), lambda i: (i, 0)),
    )

    q_pad = pl.pallas_call(
        critic_kernel,
        out_shape=jax.ShapeDtypeStruct((b_pad, OUT_PAD), jnp.float32),
        grid_spec=grid_spec,
        compiler_params=pltpu.CompilerParams(
            dimension_semantics=("parallel",),                   # megacore sharding on v7x
        ),
    )(x, prep["w1p"], prep["w2sp"], prep["w2ap"], prep["w3p"], prep["b3p"])

    return q_pad[:B, :1]


# ----------------------------------------------------------------------------- params / reference


def init_critic_params(key, state_dim, action_dim):
    """Deterministic synthetic init mirroring the PyTorch shapes.

    Weights stored transposed: (in_features, out_features); biases (1, out_features).
    """
    ks = jax.random.split(key, 8)

    def kaiming_u(k, fan_in, fan_out):
        bound = (2.0 ** 0.5) * (3.0 / fan_in) ** 0.5
        return jax.random.uniform(k, (fan_in, fan_out), jnp.float32, -bound, bound)

    def bias_u(k, fan_in, fan_out):
        bound = 1.0 / (fan_in ** 0.5)
        return jax.random.uniform(k, (1, fan_out), jnp.float32, -bound, bound)

    return {
        "w1":  kaiming_u(ks[0], state_dim, H1),
        "b1":  bias_u(ks[1], state_dim, H1),
        "w2s": kaiming_u(ks[2], H1, H2),
        # layer_2_s bias exists in the module but is never used in forward.
        "w2a": kaiming_u(ks[3], action_dim, H2),
        "b2a": bias_u(ks[4], action_dim, H2),
        "w3":  kaiming_u(ks[5], H2, 1),
        "b3":  bias_u(ks[6], H2, 1),
    }


def critic_reference(s, a, params):
    s1 = _leaky_relu(s @ params["w1"] + params["b1"])
    s11 = s1 @ params["w2s"]
    s12 = a @ params["w2a"]
    h = _leaky_relu(s11 + s12 + params["b2a"])
    return h @ params["w3"] + params["b3"]


# ----------------------------------------------------------------------------- demo


if __name__ == "__main__":
    key = jax.random.PRNGKey(0)
    k_s, k_a, k_p, k_s2, k_a2 = jax.random.split(key, 5)

    state_dim, action_dim = 24, 2
    params = init_critic_params(k_p, state_dim, action_dim)
    prep = prepare_critic_params(params, state_dim, action_dim)

    # Small batch (single grid step).
    batch = 8
    s = jax.random.normal(k_s, (batch, state_dim), jnp.float32)
    a = jax.random.uniform(k_a, (batch, action_dim), jnp.float32, -1.0, 1.0)

    q = jax.block_until_ready(critic_forward(s, a, prep))
    q_ref = critic_reference(s, a, params)
    assert q.shape == (batch, 1)
    assert jnp.allclose(q, q_ref, atol=1e-3, rtol=1e-3)

    # Larger batch exercising the multi-step batch grid + padding path.
    batch2 = 260
    s2 = jax.random.normal(k_s2, (batch2, state_dim), jnp.float32)
    a2 = jax.random.uniform(k_a2, (batch2, action_dim), jnp.float32, -1.0, 1.0)

    q2 = jax.block_until_ready(critic_forward(s2, a2, prep))
    q2_ref = critic_reference(s2, a2, params)
    assert q2.shape == (batch2, 1)
    assert jnp.allclose(q2, q2_ref, atol=1e-3, rtol=1e-3)

    print("KERNEL_OK")
</pallas_src>

<mosaic_0001>
module attributes {stable_mosaic.version = 11 : i64} {
  func.func @critic_kernel(%arg0: i32, %arg1: memref<8x256xf32, #tpu.memory_space<vmem>>, %arg2: memref<256x512xf32, #tpu.memory_space<vmem>>, %arg3: memref<512x384xf32, #tpu.memory_space<vmem>>, %arg4: memref<256x384xf32, #tpu.memory_space<vmem>>, %arg5: memref<384x128xf32, #tpu.memory_space<vmem>>, %arg6: memref<1x128xf32, #tpu.memory_space<vmem>>, %arg7: memref<8x128xf32, #tpu.memory_space<vmem>>) attributes {dimension_semantics = [#tpu.dimension_semantics<parallel>], iteration_bounds = array<i64: 1>, scalar_prefetch = 0 : i64, scratch_operands = 0 : i64, tpu.core_type = #tpu.core_type<tc>, window_params = [{transform_indices = @transform_0, window_bounds = array<i64: 8, 256>}, {pipeline_mode = #tpu.pipeline_mode<synchronous>, transform_indices = @transform_1, window_bounds = array<i64: 256, 512>}, {pipeline_mode = #tpu.pipeline_mode<synchronous>, transform_indices = @transform_2, window_bounds = array<i64: 512, 384>}, {pipeline_mode = #tpu.pipeline_mode<synchronous>, transform_indices = @transform_3, window_bounds = array<i64: 256, 384>}, {pipeline_mode = #tpu.pipeline_mode<synchronous>, transform_indices = @transform_4, window_bounds = array<i64: 384, 128>}, {pipeline_mode = #tpu.pipeline_mode<synchronous>, transform_indices = @transform_5, window_bounds = array<i64: 1, 128>}, {transform_indices = @transform_6, window_bounds = array<i64: 8, 128>}]} {
    %c0 = arith.constant 0 : index
    %c0_0 = arith.constant 0 : index
    %0 = vector.load %arg1[%c0, %c0_0] : memref<8x256xf32, #tpu.memory_space<vmem>>, vector<8x256xf32>
    %c0_1 = arith.constant 0 : index
    %c0_2 = arith.constant 0 : index
    %1 = vector.load %arg2[%c0_1, %c0_2] : memref<256x512xf32, #tpu.memory_space<vmem>>, vector<256x512xf32>
    %cst = arith.constant dense<0.000000e+00> : vector<8x512xf32>
    %2 = tpu.matmul %0, %1, %cst {dimension_numbers = #tpu.dot_dimension_numbers<[1], [0], [0], [1], [0, 0, 1, 1], [], []>} : vector<8x256xf32>, vector<256x512xf32>, vector<8x512xf32> -> vector<8x512xf32>
    %cst_3 = arith.constant 0.000000e+00 : f32
    %3 = vector.broadcast %cst_3 : f32 to vector<8x512xf32>
    %4 = arith.cmpf ogt, %2, %3 : vector<8x512xf32>
    %cst_4 = arith.constant 0.00999999977 : f32
    %5 = vector.broadcast %cst_4 : f32 to vector<8x512xf32>
    %6 = arith.mulf %5, %2 : vector<8x512xf32>
    %7 = arith.select %4, %2, %6 : vector<8x512xi1>, vector<8x512xf32>
    %c0_5 = arith.constant 0 : index
    %c0_6 = arith.constant 0 : index
    %8 = vector.load %arg3[%c0_5, %c0_6] : memref<512x384xf32, #tpu.memory_space<vmem>>, vector<512x384xf32>
    %cst_7 = arith.constant dense<0.000000e+00> : vector<8x384xf32>
    %9 = tpu.matmul %7, %8, %cst_7 {dimension_numbers = #tpu.dot_dimension_numbers<[1], [0], [0], [1], [0, 0, 1, 1], [], []>} : vector<8x512xf32>, vector<512x384xf32>, vector<8x384xf32> -> vector<8x384xf32>
    %c0_8 = arith.constant 0 : index
    %c0_9 = arith.constant 0 : index
    %10 = vector.load %arg4[%c0_8, %c0_9] : memref<256x384xf32, #tpu.memory_space<vmem>>, vector<256x384xf32>
    %cst_10 = arith.constant dense<0.000000e+00> : vector<8x384xf32>
    %11 = tpu.matmul %0, %10, %cst_10 {dimension_numbers = #tpu.dot_dimension_numbers<[1], [0], [0], [1], [0, 0, 1, 1], [], []>} : vector<8x256xf32>, vector<256x384xf32>, vector<8x384xf32> -> vector<8x384xf32>
    %12 = arith.addf %9, %11 : vector<8x384xf32>
    %cst_11 = arith.constant 0.000000e+00 : f32
    %13 = vector.broadcast %cst_11 : f32 to vector<8x384xf32>
    %14 = arith.cmpf ogt, %12, %13 : vector<8x384xf32>
    %cst_12 = arith.constant 0.00999999977 : f32
    %15 = vector.broadcast %cst_12 : f32 to vector<8x384xf32>
    %16 = arith.mulf %15, %12 : vector<8x384xf32>
    %17 = arith.select %14, %12, %16 : vector<8x384xi1>, vector<8x384xf32>
    %c0_13 = arith.constant 0 : index
    %c0_14 = arith.constant 0 : index
    %18 = vector.load %arg5[%c0_13, %c0_14] : memref<384x128xf32, #tpu.memory_space<vmem>>, vector<384x128xf32>
    %cst_15 = arith.constant dense<0.000000e+00> : vector<8x128xf32>
    %19 = tpu.matmul %17, %18, %cst_15 {dimension_numbers = #tpu.dot_dimension_numbers<[1], [0], [0], [1], [0, 0, 1, 1], [], []>} : vector<8x384xf32>, vector<384x128xf32>, vector<8x128xf32> -> vector<8x128xf32>
    %c0_16 = arith.constant 0 : index
    %c0_17 = arith.constant 0 : index
    %20 = vector.load %arg6[%c0_16, %c0_17] : memref<1x128xf32, #tpu.memory_space<vmem>>, vector<1x128xf32>
    %21 = vector.broadcast %20 : vector<1x128xf32> to vector<8x128xf32>
    %22 = arith.addf %19, %21 : vector<8x128xf32>
    %c0_18 = arith.constant 0 : index
    %c0_19 = arith.constant 0 : index
    %23 = vector.load %arg7[%c0_18, %c0_19] : memref<8x128xf32, #tpu.memory_space<vmem>>, vector<8x128xf32>
    tpu.vector_store %arg7[%c0_18, %c0_19], %22 {strides = array<i32>} : memref<8x128xf32, #tpu.memory_space<vmem>>, vector<8x128xf32>,
    return
  }
  func.func @transform_0(%arg0: i32) -> (i32, i32) {
    %c0_i32 = arith.constant 0 : i32
    %c0_i32_0 = arith.constant 0 : i32
    return %arg0, %c0_i32 : i32, i32
  }
  func.func @transform_1(%arg0: i32) -> (i32, i32) {
    %c0_i32 = arith.constant 0 : i32
    %c0_i32_0 = arith.constant 0 : i32
    %c0_i32_1 = arith.constant 0 : i32
    return %c0_i32, %c0_i32_0 : i32, i32
  }
  func.func @transform_2(%arg0: i32) -> (i32, i32) {
    %c0_i32 = arith.constant 0 : i32
    %c0_i32_0 = arith.constant 0 : i32
    %c0_i32_1 = arith.constant 0 : i32
    return %c0_i32, %c0_i32_0 : i32, i32
  }
  func.func @transform_3(%arg0: i32) -> (i32, i32) {
    %c0_i32 = arith.constant 0 : i32
    %c0_i32_0 = arith.constant 0 : i32
    %c0_i32_1 = arith.constant 0 : i32
    return %c0_i32, %c0_i32_0 : i32, i32
  }
  func.func @transform_4(%arg0: i32) -> (i32, i32) {
    %c0_i32 = arith.constant 0 : i32
    %c0_i32_0 = arith.constant 0 : i32
    %c0_i32_1 = arith.constant 0 : i32
    return %c0_i32, %c0_i32_0 : i32, i32
  }
  func.func @transform_5(%arg0: i32) -> (i32, i32) {
    %c0_i32 = arith.constant 0 : i32
    %c0_i32_0 = arith.constant 0 : i32
    %c0_i32_1 = arith.constant 0 : i32
    return %c0_i32, %c0_i32_0 : i32, i32
  }
  func.func @transform_6(%arg0: i32) -> (i32, i32) {
    %c0_i32 = arith.constant 0 : i32
    %c0_i32_0 = arith.constant 0 : i32
    return %arg0, %c0_i32 : i32, i32
  }
}

</mosaic_0001>

<llo_original>
// kernel: tpu_custom_call.1
$region0: #{tpu_custom_call.1}
  #allocation0 [shape = 'u32[]', space=smem, size = 0x4, offset = 0x4, fixed_abs, tag = 'smem constant byte address 0x4 - core index']
  #allocation1 [shape = 'u32[144,128]{1,0:T(1,128)}', space=vmem, size = 0x12000, scoped, tag = 'internal scratch']
  %s0 = inlined_call_operand.hbm [shape: f32[8,256], index: 0, kind: input, shape index: {}]
  %s1 = inlined_call_operand.hbm [shape: f32[256,512], index: 1, kind: input, shape index: {}]
  %s2 = inlined_call_operand.hbm [shape: f32[512,384], index: 2, kind: input, shape index: {}]
  %s3 = inlined_call_operand.hbm [shape: f32[256,384], index: 3, kind: input, shape index: {}]
  %s4 = inlined_call_operand.hbm [shape: f32[384,128], index: 4, kind: input, shape index: {}]
  %s5 = inlined_call_operand.vmem [shape: f32[1,128], index: 5, kind: input, shape index: {}]
  %s6 = inlined_call_operand.hbm [shape: f32[8,128], index: 6, kind: output, shape index: {}]
  %s7 = sld [smem:[#allocation0]]
  $region54: #{tpu_custom_call.1} parent=0
    _
  %s9 = ssub.s32 1, %s7
  %s10 = scalar_select 0, %s9, %s7
  $region1: #{tpu_custom_call.1} parent=0
    #allocation2 [shape = 'u8[8192]{0}', space=vmem, size = 0x2000, scoped, tag = 'input window, operand 0, single buffered']
    #allocation3 [shape = 's32[1]{0}', space=sflag, size = 0x4, scoped, tag = 'scoped memory for tpu_custom_call.1']
    #allocation4 [shape = 's32[1]{0}', space=sflag, size = 0x4, scoped, tag = 'scoped memory for tpu_custom_call.1']
    #allocation5 [shape = 'u8[524288]{0}', space=vmem, size = 0x80000, scoped, tag = 'input window, operand 1, single buffered']
    #allocation6 [shape = 's32[1]{0}', space=sflag, size = 0x4, scoped, tag = 'scoped memory for tpu_custom_call.1']
    #allocation7 [shape = 'u8[786432]{0}', space=vmem, size = 0xc0000, scoped, tag = 'input window, operand 2, single buffered']
    #allocation8 [shape = 'u8[393216]{0}', space=vmem, size = 0x60000, scoped, tag = 'input window, operand 3, single buffered']
    #allocation9 [shape = 's32[1]{0}', space=sflag, size = 0x4, scoped, tag = 'scoped memory for tpu_custom_call.1']
    #allocation10 [shape = 'u8[196608]{0}', space=vmem, size = 0x30000, scoped, tag = 'input window, operand 4, single buffered']
    #allocation11 [shape = 'u8[4096]{0}', space=vmem, size = 0x1000, scoped, tag = 'output window, operand 0, single buffered']
    %11 = vsyncpa [#allocation3], 0
    %12 = vsyncpa [#allocation6], 0
    %13 = vsyncpa [#allocation9], 0
    %14 = vsyncpa [#allocation4], 0
    // Predicated region
    $region2: #{tpu_custom_call.1} parent=1 // pred_check
      _
    $region3: #{tpu_custom_call.1} parent=1 // pred_check_branch
      %16 = sbr.rel (0) target = $region5
    $region4: #{tpu_custom_call.1} parent=1 // pred_region
      %s18 = ssub.s32 256, 256
      %19 = vsyncadd [#allocation3], %s18
      %s21 = sshll.u32 [#allocation2], 4
      %s22 = int_to_ptr.vmem [resolvable:$true] %s21
      %24 = dma.hbm_to_vmem [thread:$0]  %s0, 256, %s22, [#allocation3]
    $region5: #{tpu_custom_call.1} parent=1 // pred_fallthru
      _
    // Predicated region
    $region6: #{tpu_custom_call.1} parent=1 // pred_check
      _
    $region7: #{tpu_custom_call.1} parent=1 // pred_check_branch
      %26 = sbr.rel (0) target = $region9
    $region8: #{tpu_custom_call.1} parent=1 // pred_region
      %s28 = ssub.s32 16384, 16384
      %29 = vsyncadd [#allocation6], %s28
      %s30 = sshll.u32 [#allocation5], 4
      %s31 = int_to_ptr.vmem [resolvable:$true] %s30
      %36 = dma.hbm_to_vmem [thread:$0]  %s1, 16384, %s31, [#allocation6], 512, 512, 32
    $region9: #{tpu_custom_call.1} parent=1 // pred_fallthru
      _
    // Predicated region
    $region10: #{tpu_custom_call.1} parent=1 // pred_check
      _
    $region11: #{tpu_custom_call.1} parent=1 // pred_check_branch
      %38 = sbr.rel (0) target = $region13
    $region12: #{tpu_custom_call.1} parent=1 // pred_region
      %s40 = ssub.s32 24576, 24576
      %41 = vsyncadd [#allocation6], %s40
      %s42 = sshll.u32 [#allocation7], 4
      %s43 = int_to_ptr.vmem [resolvable:$true] %s42
      %48 = dma.hbm_to_vmem [thread:$0]  %s2, 24576, %s43, [#allocation6], 384, 384, 24
    $region13: #{tpu_custom_call.1} parent=1 // pred_fallthru
      _
    // Predicated region
    $region14: #{tpu_custom_call.1} parent=1 // pred_check
      _
    $region15: #{tpu_custom_call.1} parent=1 // pred_check_branch
      %50 = sbr.rel (0) target = $region17
    $region16: #{tpu_custom_call.1} parent=1 // pred_region
      %s52 = ssub.s32 12288, 12288
      %53 = vsyncadd [#allocation9], %s52
      %s54 = sshll.u32 [#allocation8], 4
      %s55 = int_to_ptr.vmem [resolvable:$true] %s54
      %60 = dma.hbm_to_vmem [thread:$0]  %s3, 12288, %s55, [#allocation9], 384, 384, 24
    $region17: #{tpu_custom_call.1} parent=1 // pred_fallthru
      _
    // Predicated region
    $region18: #{tpu_custom_call.1} parent=1 // pred_check
      _
    $region19: #{tpu_custom_call.1} parent=1 // pred_check_branch
      %62 = sbr.rel (0) target = $region21
    $region20: #{tpu_custom_call.1} parent=1 // pred_region
      %s64 = ssub.s32 6144, 6144
      %65 = vsyncadd [#allocation9], %s64
      %s66 = sshll.u32 [#allocation10], 4
      %s67 = int_to_ptr.vmem [resolvable:$true] %s66
      %72 = dma.hbm_to_vmem [thread:$0]  %s4, 6144, %s67, [#allocation9], 128, 128, 8
    $region21: #{tpu_custom_call.1} parent=1 // pred_fallthru
      _
    // Predicated region
    $region22: #{tpu_custom_call.1} parent=1 // pred_check
      _
    $region23: #{tpu_custom_call.1} parent=1 // pred_check_branch
      %74 = sbr.rel (0) target = $region25
    $region24: #{tpu_custom_call.1} parent=1 // pred_region
      _
    $region25: #{tpu_custom_call.1} parent=1 // pred_fallthru
      _
    // Predicated region
    $region26: #{tpu_custom_call.1} parent=1 // pred_check
      _
    $region27: #{tpu_custom_call.1} parent=1 // pred_check_branch
      %76 = sbr.rel (0) target = $region29
    $region28: #{tpu_custom_call.1} parent=1 // pred_region
      %77 = dma.done [#allocation3], 256
    $region29: #{tpu_custom_call.1} parent=1 // pred_fallthru
      _
    // Predicated region
    $region30: #{tpu_custom_call.1} parent=1 // pred_check
      _
    $region31: #{tpu_custom_call.1} parent=1 // pred_check_branch
      %79 = sbr.rel (0) target = $region33
    $region32: #{tpu_custom_call.1} parent=1 // pred_region
      %80 = dma.done [#allocation6], 16384
    $region33: #{tpu_custom_call.1} parent=1 // pred_fallthru
      _
    // Predicated region
    $region34: #{tpu_custom_call.1} parent=1 // pred_check
      _
    $region35: #{tpu_custom_call.1} parent=1 // pred_check_branch
      %82 = sbr.rel (0) target = $region37
    $region36: #{tpu_custom_call.1} parent=1 // pred_region
      %83 = dma.done [#allocation6], 24576
    $region37: #{tpu_custom_call.1} parent=1 // pred_fallthru
      _
    // Predicated region
    $region38: #{tpu_custom_call.1} parent=1 // pred_check
      _
    $region39: #{tpu_custom_call.1} parent=1 // pred_check_branch
      %85 = sbr.rel (0) target = $region41
    $region40: #{tpu_custom_call.1} parent=1 // pred_region
      %86 = dma.done [#allocation9], 12288
    $region41: #{tpu_custom_call.1} parent=1 // pred_fallthru
      _
    // Predicated region
    $region42: #{tpu_custom_call.1} parent=1 // pred_check
      _
    $region43: #{tpu_custom_call.1} parent=1 // pred_check_branch
      %88 = sbr.rel (0) target = $region45
    $region44: #{tpu_custom_call.1} parent=1 // pred_region
      %89 = dma.done [#allocation9], 6144
    $region45: #{tpu_custom_call.1} parent=1 // pred_fallthru
      _
    %v90 = vld [vmem:[#allocation2] sm:$0xff]
    %v91 = vld [vmem:[#allocation2 + $0x8] sm:$0xff]
    %v92 = vld [vmem:[#allocation5] sm:$0xff]
    %v93 = vld [vmem:[#allocation5 + $0x8] sm:$0xff]
    %v94 = vld [vmem:[#allocation5 + $0x10] sm:$0xff]
    %v95 = vld [vmem:[#allocation5 + $0x18] sm:$0xff]
    %v96 = vld [vmem:[#allocation5 + $0x20] sm:$0xff]
    %v97 = vld [vmem:[#allocation5 + $0x28] sm:$0xff]
    %v98 = vld [vmem:[#allocation5 + $0x30] sm:$0xff]
    %v99 = vld [vmem:[#allocation5 + $0x38] sm:$0xff]
    %v100 = vld [vmem:[#allocation5 + $0x40] sm:$0xff]
    %v101 = vld [vmem:[#allocation5 + $0x48] sm:$0xff]
    %v102 = vld [vmem:[#allocation5 + $0x50] sm:$0xff]
    %v103 = vld [vmem:[#allocation5 + $0x58] sm:$0xff]
    %v104 = vld [vmem:[#allocation5 + $0x60] sm:$0xff]
    %v105 = vld [vmem:[#allocation5 + $0x68] sm:$0xff]
    %v106 = vld [vmem:[#allocation5 + $0x70] sm:$0xff]
    %v107 = vld [vmem:[#allocation5 + $0x78] sm:$0xff]
    %v108 = vld [vmem:[#allocation5 + $0x80] sm:$0xff]
    %v109 = vld [vmem:[#allocation5 + $0x88] sm:$0xff]
    %v110 = vld [vmem:[#allocation5 + $0x90] sm:$0xff]
    %v111 = vld [vmem:[#allocation5 + $0x98] sm:$0xff]
    %v112 = vld [vmem:[#allocation5 + $0xa0] sm:$0xff]
    %v113 = vld [vmem:[#allocation5 + $0xa8] sm:$0xff]
    %v114 = vld [vmem:[#allocation5 + $0xb0] sm:$0xff]
    %v115 = vld [vmem:[#allocation5 + $0xb8] sm:$0xff]
    %v116 = vld [vmem:[#allocation5 + $0xc0] sm:$0xff]
    %v117 = vld [vmem:[#allocation5 + $0xc8] sm:$0xff]
    %v118 = vld [vmem:[#allocation5 + $0xd0] sm:$0xff]
    %v119 = vld [vmem:[#allocation5 + $0xd8] sm:$0xff]
    %v120 = vld [vmem:[#allocation5 + $0xe0] sm:$0xff]
    %v121 = vld [vmem:[#allocation5 + $0xe8] sm:$0xff]
    %v122 = vld [vmem:[#allocation5 + $0xf0] sm:$0xff]
    %v123 = vld [vmem:[#allocation5 + $0xf8] sm:$0xff]
    %v124 = vld [vmem:[#allocation5 + $0x100] sm:$0xff]
    %v125 = vld [vmem:[#allocation5 + $0x108] sm:$0xff]
    %v126 = vld [vmem:[#allocation5 + $0x110] sm:$0xff]
    %v127 = vld [vmem:[#allocation5 + $0x118] sm:$0xff]
    %v128 = vld [vmem:[#allocation5 + $0x120] sm:$0xff]
    %v129 = vld [vmem:[#allocation5 + $0x128] sm:$0xff]
    %v130 = vld [vmem:[#allocation5 + $0x130] sm:$0xff]
    %v131 = vld [vmem:[#allocation5 + $0x138] sm:$0xff]
    %v132 = vld [vmem:[#allocation5 + $0x140] sm:$0xff]
    %v133 = vld [vmem:[#allocation5 + $0x148] sm:$0xff]
    %v134 = vld [vmem:[#allocation5 + $0x150] sm:$0xff]
    %v135 = vld [vmem:[#allocation5 + $0x158] sm:$0xff]
    %v136 = vld [vmem:[#allocation5 + $0x160] sm:$0xff]
    %v137 = vld [vmem:[#allocation5 + $0x168] sm:$0xff]
    %v138 = vld [vmem:[#allocation5 + $0x170] sm:$0xff]
    %v139 = vld [vmem:[#allocation5 + $0x178] sm:$0xff]
    %v140 = vld [vmem:[#allocation5 + $0x180] sm:$0xff]
    %v141 = vld [vmem:[#allocation5 + $0x188] sm:$0xff]
    %v142 = vld [vmem:[#allocation5 + $0x190] sm:$0xff]
    %v143 = vld [vmem:[#allocation5 + $0x198] sm:$0xff]
    %v144 = vld [vmem:[#allocation5 + $0x1a0] sm:$0xff]
    %v145 = vld [vmem:[#allocation5 + $0x1a8] sm:$0xff]
    %v146 = vld [vmem:[#allocation5 + $0x1b0] sm:$0xff]
    %v147 = vld [vmem:[#allocation5 + $0x1b8] sm:$0xff]
    %v148 = vld [vmem:[#allocation5 + $0x1c0] sm:$0xff]
    %v149 = vld [vmem:[#allocation5 + $0x1c8] sm:$0xff]
    %v150 = vld [vmem:[#allocation5 + $0x1d0] sm:$0xff]
    %v151 = vld [vmem:[#allocation5 + $0x1d8] sm:$0xff]
    %v152 = vld [vmem:[#allocation5 + $0x1e0] sm:$0xff]
    %v153 = vld [vmem:[#allocation5 + $0x1e8] sm:$0xff]
    %v154 = vld [vmem:[#allocation5 + $0x1f0] sm:$0xff]
    %v155 = vld [vmem:[#allocation5 + $0x1f8] sm:$0xff]
    %v156 = vld [vmem:[#allocation5 + $0x200] sm:$0xff]
    %v157 = vld [vmem:[#allocation5 + $0x208] sm:$0xff]
    %v158 = vld [vmem:[#allocation5 + $0x210] sm:$0xff]
    %v159 = vld [vmem:[#allocation5 + $0x218] sm:$0xff]
    %v160 = vld [vmem:[#allocation5 + $0x220] sm:$0xff]
    %v161 = vld [vmem:[#allocation5 + $0x228] sm:$0xff]
    %v162 = vld [vmem:[#allocation5 + $0x230] sm:$0xff]
    %v163 = vld [vmem:[#allocation5 + $0x238] sm:$0xff]
    %v164 = vld [vmem:[#allocation5 + $0x240] sm:$0xff]
    %v165 = vld [vmem:[#allocation5 + $0x248] sm:$0xff]
    %v166 = vld [vmem:[#allocation5 + $0x250] sm:$0xff]
    %v167 = vld [vmem:[#allocation5 + $0x258] sm:$0xff]
    %v168 = vld [vmem:[#allocation5 + $0x260] sm:$0xff]
    %v169 = vld [vmem:[#allocation5 + $0x268] sm:$0xff]
    %v170 = vld [vmem:[#allocation5 + $0x270] sm:$0xff]
    %v171 = vld [vmem:[#allocation5 + $0x278] sm:$0xff]
    %v172 = vld [vmem:[#allocation5 + $0x280] sm:$0xff]
    %v173 = vld [vmem:[#allocation5 + $0x288] sm:$0xff]
    %v174 = vld [vmem:[#allocation5 + $0x290] sm:$0xff]
    %v175 = vld [vmem:[#allocation5 + $0x298] sm:$0xff]
    %v176 = vld [vmem:[#allocation5 + $0x2a0] sm:$0xff]
    %v177 = vld [vmem:[#allocation5 + $0x2a8] sm:$0xff]
    %v178 = vld [vmem:[#allocation5 + $0x2b0] sm:$0xff]
    %v179 = vld [vmem:[#allocation5 + $0x2b8] sm:$0xff]
    %v180 = vld [vmem:[#allocation5 + $0x2c0] sm:$0xff]
    %v181 = vld [vmem:[#allocation5 + $0x2c8] sm:$0xff]
    %v182 = vld [vmem:[#allocation5 + $0x2d0] sm:$0xff]
    %v183 = vld [vmem:[#allocation5 + $0x2d8] sm:$0xff]
    %v184 = vld [vmem:[#allocation5 + $0x2e0] sm:$0xff]
    %v185 = vld [vmem:[#allocation5 + $0x2e8] sm:$0xff]
    %v186 = vld [vmem:[#allocation5 + $0x2f0] sm:$0xff]
    %v187 = vld [vmem:[#allocation5 + $0x2f8] sm:$0xff]
    %v188 = vld [vmem:[#allocation5 + $0x300] sm:$0xff]
    %v189 = vld [vmem:[#allocation5 + $0x308] sm:$0xff]
    %v190 = vld [vmem:[#allocation5 + $0x310] sm:$0xff]
    %v191 = vld [vmem:[#allocation5 + $0x318] sm:$0xff]
    %v192 = vld [vmem:[#allocation5 + $0x320] sm:$0xff]
    %v193 = vld [vmem:[#allocation5 + $0x328] sm:$0xff]
    %v194 = vld [vmem:[#allocation5 + $0x330] sm:$0xff]
    %v195 = vld [vmem:[#allocation5 + $0x338] sm:$0xff]
    %v196 = vld [vmem:[#allocation5 + $0x340] sm:$0xff]
    %v197 = vld [vmem:[#allocation5 + $0x348] sm:$0xff]
    %v198 = vld [vmem:[#allocation5 + $0x350] sm:$0xff]
    %v199 = vld [vmem:[#allocation5 + $0x358] sm:$0xff]
    %v200 = vld [vmem:[#allocation5 + $0x360] sm:$0xff]
    %v201 = vld [vmem:[#allocation5 + $0x368] sm:$0xff]
    %v202 = vld [vmem:[#allocation5 + $0x370] sm:$0xff]
    %v203 = vld [vmem:[#allocation5 + $0x378] sm:$0xff]
    %v204 = vld [vmem:[#allocation5 + $0x380] sm:$0xff]
    %v205 = vld [vmem:[#allocation5 + $0x388] sm:$0xff]
    %v206 = vld [vmem:[#allocation5 + $0x390] sm:$0xff]
    %v207 = vld [vmem:[#allocation5 + $0x398] sm:$0xff]
    %v208 = vld [vmem:[#allocation5 + $0x3a0] sm:$0xff]
    %v209 = vld [vmem:[#allocation5 + $0x3a8] sm:$0xff]
    %v210 = vld [vmem:[#allocation5 + $0x3b0] sm:$0xff]
    %v211 = vld [vmem:[#allocation5 + $0x3b8] sm:$0xff]
    %v212 = vld [vmem:[#allocation5 + $0x3c0] sm:$0xff]
    %v213 = vld [vmem:[#allocation5 + $0x3c8] sm:$0xff]
    %v214 = vld [vmem:[#allocation5 + $0x3d0] sm:$0xff]
    %v215 = vld [vmem:[#allocation5 + $0x3d8] sm:$0xff]
    %v216 = vld [vmem:[#allocation5 + $0x3e0] sm:$0xff]
    %v217 = vld [vmem:[#allocation5 + $0x3e8] sm:$0xff]
    %v218 = vld [vmem:[#allocation5 + $0x3f0] sm:$0xff]
    %v219 = vld [vmem:[#allocation5 + $0x3f8] sm:$0xff]
    %220 = vmatprep.subr.mxu0 %v153
    %221 = vmatpush1.msra.mxu0 %v152
    %222 = vmatprep.subr.mxu0 %v149
    %223 = vmatpush1.msra.mxu0 %v148
    %224 = vmatprep.subr.mxu0 %v145
    %225 = vmatpush1.msra.mxu0 %v144
    %226 = vmatprep.subr.mxu0 %v141
    %227 = vmatpush1.msra.mxu0 %v140
    %228 = vmatprep.subr.mxu0 %v137
    %229 = vmatpush1.msra.mxu0 %v136
    %230 = vmatprep.subr.mxu0 %v133
    %231 = vmatpush1.msra.mxu0 %v132
    %232 = vmatprep.subr.mxu0 %v129
    %233 = vmatpush1.msra.mxu0 %v128
    %234 = vmatprep.subr.mxu0 %v125
    %235 = vmatpush1.msra.mxu0 %v124
    %236 = vmatprep.subr.mxu0 %v121
    %237 = vmatpush1.msra.mxu0 %v120
    %238 = vmatprep.subr.mxu0 %v117
    %239 = vmatpush1.msra.mxu0 %v116
    %240 = vmatprep.subr.mxu0 %v113
    %241 = vmatpush1.msra.mxu0 %v112
    %242 = vmatprep.subr.mxu0 %v109
    %243 = vmatpush1.msra.mxu0 %v108
    %244 = vmatprep.subr.mxu0 %v105
    %245 = vmatpush1.msra.mxu0 %v104
    %246 = vmatprep.subr.mxu0 %v101
    %247 = vmatpush1.msra.mxu0 %v100
    %248 = vmatprep.subr.mxu0 %v97
    %249 = vmatpush1.msra.mxu0 %v96
    %250 = vmatprep.subr.mxu0 %v93
    %251 = vmatpush1.msra.mxu0 %v92
    %252 = vmatprep.subr.mxu0 %v217
    %253 = vmatpush2.msra.mxu0 %v216
    %254 = vmatprep.subr.mxu0 %v213
    %255 = vmatpush2.msra.mxu0 %v212
    %256 = vmatprep.subr.mxu0 %v209
    %257 = vmatpush2.msra.mxu0 %v208
    %258 = vmatprep.subr.mxu0 %v205
    %259 = vmatpush2.msra.mxu0 %v204
    %260 = vmatprep.subr.mxu0 %v201
    %261 = vmatpush2.msra.mxu0 %v200
    %262 = vmatprep.subr.mxu0 %v197
    %263 = vmatpush2.msra.mxu0 %v196
    %264 = vmatprep.subr.mxu0 %v193
    %265 = vmatpush2.msra.mxu0 %v192
    %266 = vmatprep.subr.mxu0 %v189
    %267 = vmatpush2.msra.mxu0 %v188
    %268 = vmatprep.subr.mxu0 %v185
    %269 = vmatpush2.msra.mxu0 %v184
    %270 = vmatprep.subr.mxu0 %v181
    %271 = vmatpush2.msra.mxu0 %v180
    %272 = vmatprep.subr.mxu0 %v177
    %273 = vmatpush2.msra.mxu0 %v176
    %274 = vmatprep.subr.mxu0 %v173
    %275 = vmatpush2.msra.mxu0 %v172
    %276 = vmatprep.subr.mxu0 %v169
    %277 = vmatpush2.msra.mxu0 %v168
    %278 = vmatprep.subr.mxu0 %v165
    %279 = vmatpush2.msra.mxu0 %v164
    %280 = vmatprep.subr.mxu0 %v161
    %281 = vmatpush2.msra.mxu0 %v160
    %282 = vmatprep.subr.mxu0 %v157
    %283 = vmatpush2.msra.mxu0 %v156
    %284 = vmatprep.mubr.f32.mxu0 %v91
    %285 = vmatmul.mubr.f32.gmra.mxu0 %v90
    %v286 = vpop.f32.mrf.mxu0
    %v287 = vadd.f32 0.0, %v286
    %v288 = vpop.f32.mrf.mxu0
    %v289 = vadd.f32 0.0, %v288
    %290 = vdwg.mxu0
    %291 = vmatprep.subr.mxu0 %v155
    %292 = vmatpush1.msra.mxu0 %v154
    %293 = vmatprep.subr.mxu0 %v151
    %294 = vmatpush1.msra.mxu0 %v150
    %295 = vmatprep.subr.mxu0 %v147
    %296 = vmatpush1.msra.mxu0 %v146
    %297 = vmatprep.subr.mxu0 %v143
    %298 = vmatpush1.msra.mxu0 %v142
    %299 = vmatprep.subr.mxu0 %v139
    %300 = vmatpush1.msra.mxu0 %v138
    %301 = vmatprep.subr.mxu0 %v135
    %302 = vmatpush1.msra.mxu0 %v134
    %303 = vmatprep.subr.mxu0 %v131
    %304 = vmatpush1.msra.mxu0 %v130
    %305 = vmatprep.subr.mxu0 %v127
    %306 = vmatpush1.msra.mxu0 %v126
    %307 = vmatprep.subr.mxu0 %v123
    %308 = vmatpush1.msra.mxu0 %v122
    %309 = vmatprep.subr.mxu0 %v119
    %310 = vmatpush1.msra.mxu0 %v118
    %311 = vmatprep.subr.mxu0 %v115
    %312 = vmatpush1.msra.mxu0 %v114
    %313 = vmatprep.subr.mxu0 %v111
    %314 = vmatpush1.msra.mxu0 %v110
    %315 = vmatprep.subr.mxu0 %v107
    %316 = vmatpush1.msra.mxu0 %v106
    %317 = vmatprep.subr.mxu0 %v103
    %318 = vmatpush1.msra.mxu0 %v102
    %319 = vmatprep.subr.mxu0 %v99
    %320 = vmatpush1.msra.mxu0 %v98
    %321 = vmatprep.subr.mxu0 %v95
    %322 = vmatpush1.msra.mxu0 %v94
    %323 = vmatprep.subr.mxu0 %v219
    %324 = vmatpush2.msra.mxu0 %v218
    %325 = vmatprep.subr.mxu0 %v215
    %326 = vmatpush2.msra.mxu0 %v214
    %327 = vmatprep.subr.mxu0 %v211
    %328 = vmatpush2.msra.mxu0 %v210
    %329 = vmatprep.subr.mxu0 %v207
    %330 = vmatpush2.msra.mxu0 %v206
    %331 = vmatprep.subr.mxu0 %v203
    %332 = vmatpush2.msra.mxu0 %v202
    %333 = vmatprep.subr.mxu0 %v199
    %334 = vmatpush2.msra.mxu0 %v198
    %335 = vmatprep.subr.mxu0 %v195
    %336 = vmatpush2.msra.mxu0 %v194
    %337 = vmatprep.subr.mxu0 %v191
    %338 = vmatpush2.msra.mxu0 %v190
    %339 = vmatprep.subr.mxu0 %v187
    %340 = vmatpush2.msra.mxu0 %v186
    %341 = vmatprep.subr.mxu0 %v183
    %342 = vmatpush2.msra.mxu0 %v182
    %343 = vmatprep.subr.mxu0 %v179
    %344 = vmatpush2.msra.mxu0 %v178
    %345 = vmatprep.subr.mxu0 %v175
    %346 = vmatpush2.msra.mxu0 %v174
    %347 = vmatprep.subr.mxu0 %v171
    %348 = vmatpush2.msra.mxu0 %v170
    %349 = vmatprep.subr.mxu0 %v167
    %350 = vmatpush2.msra.mxu0 %v166
    %351 = vmatprep.subr.mxu0 %v163
    %352 = vmatpush2.msra.mxu0 %v162
    %353 = vmatprep.subr.mxu0 %v159
    %354 = vmatpush2.msra.mxu0 %v158
    %355 = vmatprep.mubr.f32.mxu0 %v91
    %356 = vmatmul.mubr.f32.gmra.mxu0 %v90
    %v357 = vpop.f32.mrf.mxu0
    %v358 = vadd.f32 0.0, %v357
    %v359 = vpop.f32.mrf.mxu0
    %v360 = vadd.f32 0.0, %v359
    %361 = vdwg.mxu0
    %vm362 = vcmp.gt.f32.partialorder %v287, 0.0
    %vm363 = vcmp.gt.f32.partialorder %v289, 0.0
    %vm364 = vcmp.gt.f32.partialorder %v358, 0.0
    %vm365 = vcmp.gt.f32.partialorder %v360, 0.0
    %v366 = vmul.f32 %v287, 0.01
    %v367 = vmul.f32 %v289, 0.01
    %v368 = vmul.f32 %v358, 0.01
    %v369 = vmul.f32 %v360, 0.01
    %v370 = vsel %vm362, %v287, %v366
    %v371 = vsel %vm363, %v289, %v367
    %v372 = vsel %vm364, %v358, %v368
    %v373 = vsel %vm365, %v360, %v369
    %v374 = vld [vmem:[#allocation7] sm:$0xff]
    %v375 = vld [vmem:[#allocation7 + $0x8] sm:$0xff]
    %v376 = vld [vmem:[#allocation7 + $0x10] sm:$0xff]
    %v377 = vld [vmem:[#allocation7 + $0x18] sm:$0xff]
    %v378 = vld [vmem:[#allocation7 + $0x20] sm:$0xff]
    %v379 = vld [vmem:[#allocation7 + $0x28] sm:$0xff]
    %v380 = vld [vmem:[#allocation7 + $0x30] sm:$0xff]
    %v381 = vld [vmem:[#allocation7 + $0x38] sm:$0xff]
    %v382 = vld [vmem:[#allocation7 + $0x40] sm:$0xff]
    %v383 = vld [vmem:[#allocation7 + $0x48] sm:$0xff]
    %v384 = vld [vmem:[#allocation7 + $0x50] sm:$0xff]
    %v385 = vld [vmem:[#allocation7 + $0x58] sm:$0xff]
    %v386 = vld [vmem:[#allocation7 + $0x60] sm:$0xff]
    %v387 = vld [vmem:[#allocation7 + $0x68] sm:$0xff]
    %v388 = vld [vmem:[#allocation7 + $0x70] sm:$0xff]
    %v389 = vld [vmem:[#allocation7 + $0x78] sm:$0xff]
    %v390 = vld [vmem:[#allocation7 + $0x80] sm:$0xff]
    %v391 = vld [vmem:[#allocation7 + $0x88] sm:$0xff]
    %v392 = vld [vmem:[#allocation7 + $0x90] sm:$0xff]
    %v393 = vld [vmem:[#allocation7 + $0x98] sm:$0xff]
    %v394 = vld [vmem:[#allocation7 + $0xa0] sm:$0xff]
    %v395 = vld [vmem:[#allocation7 + $0xa8] sm:$0xff]
    %v396 = vld [vmem:[#allocation7 + $0xb0] sm:$0xff]
    %v397 = vld [vmem:[#allocation7 + $0xb8] sm:$0xff]
    %v398 = vld [vmem:[#allocation7 + $0xc0] sm:$0xff]
    %v399 = vld [vmem:[#allocation7 + $0xc8] sm:$0xff]
    %v400 = vld [vmem:[#allocation7 + $0xd0] sm:$0xff]
    %v401 = vld [vmem:[#allocation7 + $0xd8] sm:$0xff]
    %v402 = vld [vmem:[#allocation7 + $0xe0] sm:$0xff]
    %v403 = vld [vmem:[#allocation7 + $0xe8] sm:$0xff]
    %v404 = vld [vmem:[#allocation7 + $0xf0] sm:$0xff]
    %v405 = vld [vmem:[#allocation7 + $0xf8] sm:$0xff]
    %v406 = vld [vmem:[#allocation7 + $0x100] sm:$0xff]
    %v407 = vld [vmem:[#allocation7 + $0x108] sm:$0xff]
    %v408 = vld [vmem:[#allocation7 + $0x110] sm:$0xff]
    %v409 = vld [vmem:[#allocation7 + $0x118] sm:$0xff]
    %v410 = vld [vmem:[#allocation7 + $0x120] sm:$0xff]
    %v411 = vld [vmem:[#allocation7 + $0x128] sm:$0xff]
    %v412 = vld [vmem:[#allocation7 + $0x130] sm:$0xff]
    %v413 = vld [vmem:[#allocation7 + $0x138] sm:$0xff]
    %v414 = vld [vmem:[#allocation7 + $0x140] sm:$0xff]
    %v415 = vld [vmem:[#allocation7 + $0x148] sm:$0xff]
    %v416 = vld [vmem:[#allocation7 + $0x150] sm:$0xff]
    %v417 = vld [vmem:[#allocation7 + $0x158] sm:$0xff]
    %v418 = vld [vmem:[#allocation7 + $0x160] sm:$0xff]
    %v419 = vld [vmem:[#allocation7 + $0x168] sm:$0xff]
    %v420 = vld [vmem:[#allocation7 + $0x170] sm:$0xff]
    %v421 = vld [vmem:[#allocation7 + $0x178] sm:$0xff]
    %v422 = vld [vmem:[#allocation7 + $0x180] sm:$0xff]
    %v423 = vld [vmem:[#allocation7 + $0x188] sm:$0xff]
    %v424 = vld [vmem:[#allocation7 + $0x190] sm:$0xff]
    %v425 = vld [vmem:[#allocation7 + $0x198] sm:$0xff]
    %v426 = vld [vmem:[#allocation7 + $0x1a0] sm:$0xff]
    %v427 = vld [vmem:[#allocation7 + $0x1a8] sm:$0xff]
    %v428 = vld [vmem:[#allocation7 + $0x1b0] sm:$0xff]
    %v429 = vld [vmem:[#allocation7 + $0x1b8] sm:$0xff]
    %v430 = vld [vmem:[#allocation7 + $0x1c0] sm:$0xff]
    %v431 = vld [vmem:[#allocation7 + $0x1c8] sm:$0xff]
    %v432 = vld [vmem:[#allocation7 + $0x1d0] sm:$0xff]
    %v433 = vld [vmem:[#allocation7 + $0x1d8] sm:$0xff]
    %v434 = vld [vmem:[#allocation7 + $0x1e0] sm:$0xff]
    %v435 = vld [vmem:[#allocation7 + $0x1e8] sm:$0xff]
    %v436 = vld [vmem:[#allocation7 + $0x1f0] sm:$0xff]
    %v437 = vld [vmem:[#allocation7 + $0x1f8] sm:$0xff]
    %v438 = vld [vmem:[#allocation7 + $0x200] sm:$0xff]
    %v439 = vld [vmem:[#allocation7 + $0x208] sm:$0xff]
    %v440 = vld [vmem:[#allocation7 + $0x210] sm:$0xff]
    %v441 = vld [vmem:[#allocation7 + $0x218] sm:$0xff]
    %v442 = vld [vmem:[#allocation7 + $0x220] sm:$0xff]
    %v443 = vld [vmem:[#allocation7 + $0x228] sm:$0xff]
    %v444 = vld [vmem:[#allocation7 + $0x230] sm:$0xff]
    %v445 = vld [vmem:[#allocation7 + $0x238] sm:$0xff]
    %v446 = vld [vmem:[#allocation7 + $0x240] sm:$0xff]
    %v447 = vld [vmem:[#allocation7 + $0x248] sm:$0xff]
    %v448 = vld [vmem:[#allocation7 + $0x250] sm:$0xff]
    %v449 = vld [vmem:[#allocation7 + $0x258] sm:$0xff]
    %v450 = vld [vmem:[#allocation7 + $0x260] sm:$0xff]
    %v451 = vld [vmem:[#allocation7 + $0x268] sm:$0xff]
    %v452 = vld [vmem:[#allocation7 + $0x270] sm:$0xff]
    %v453 = vld [vmem:[#allocation7 + $0x278] sm:$0xff]
    %v454 = vld [vmem:[#allocation7 + $0x280] sm:$0xff]
    %v455 = vld [vmem:[#allocation7 + $0x288] sm:$0xff]
    %v456 = vld [vmem:[#allocation7 + $0x290] sm:$0xff]
    %v457 = vld [vmem:[#allocation7 + $0x298] sm:$0xff]
    %v458 = vld [vmem:[#allocation7 + $0x2a0] sm:$0xff]
    %v459 = vld [vmem:[#allocation7 + $0x2a8] sm:$0xff]
    %v460 = vld [vmem:[#allocation7 + $0x2b0] sm:$0xff]
    %v461 = vld [vmem:[#allocation7 + $0x2b8] sm:$0xff]
    %v462 = vld [vmem:[#allocation7 + $0x2c0] sm:$0xff]
    %v463 = vld [vmem:[#allocation7 + $0x2c8] sm:$0xff]
    %v464 = vld [vmem:[#allocation7 + $0x2d0] sm:$0xff]
    %v465 = vld [vmem:[#allocation7 + $0x2d8] sm:$0xff]
    %v466 = vld [vmem:[#allocation7 + $0x2e0] sm:$0xff]
    %v467 = vld [vmem:[#allocation7 + $0x2e8] sm:$0xff]
    %v468 = vld [vmem:[#allocation7 + $0x2f0] sm:$0xff]
    %v469 = vld [vmem:[#allocation7 + $0x2f8] sm:$0xff]
    %v470 = vld [vmem:[#allocation7 + $0x300] sm:$0xff]
    %v471 = vld [vmem:[#allocation7 + $0x308] sm:$0xff]
    %v472 = vld [vmem:[#allocation7 + $0x310] sm:$0xff]
    %v473 = vld [vmem:[#allocation7 + $0x318] sm:$0xff]
    %v474 = vld [vmem:[#allocation7 + $0x320] sm:$0xff]
    %v475 = vld [vmem:[#allocation7 + $0x328] sm:$0xff]
    %v476 = vld [vmem:[#allocation7 + $0x330] sm:$0xff]
    %v477 = vld [vmem:[#allocation7 + $0x338] sm:$0xff]
    %v478 = vld [vmem:[#allocation7 + $0x340] sm:$0xff]
    %v479 = vld [vmem:[#allocation7 + $0x348] sm:$0xff]
    %v480 = vld [vmem:[#allocation7 + $0x350] sm:$0xff]
    %v481 = vld [vmem:[#allocation7 + $0x358] sm:$0xff]
    %v482 = vld [vmem:[#allocation7 + $0x360] sm:$0xff]
    %v483 = vld [vmem:[#allocation7 + $0x368] sm:$0xff]
    %v484 = vld [vmem:[#allocation7 + $0x370] sm:$0xff]
    %v485 = vld [vmem:[#allocation7 + $0x378] sm:$0xff]
    %v486 = vld [vmem:[#allocation7 + $0x380] sm:$0xff]
    %v487 = vld [vmem:[#allocation7 + $0x388] sm:$0xff]
    %v488 = vld [vmem:[#allocation7 + $0x390] sm:$0xff]
    %v489 = vld [vmem:[#allocation7 + $0x398] sm:$0xff]
    %v490 = vld [vmem:[#allocation7 + $0x3a0] sm:$0xff]
    %v491 = vld [vmem:[#allocation7 + $0x3a8] sm:$0xff]
    %v492 = vld [vmem:[#allocation7 + $0x3b0] sm:$0xff]
    %v493 = vld [vmem:[#allocation7 + $0x3b8] sm:$0xff]
    %v494 = vld [vmem:[#allocation7 + $0x3c0] sm:$0xff]
    %v495 = vld [vmem:[#allocation7 + $0x3c8] sm:$0xff]
    %v496 = vld [vmem:[#allocation7 + $0x3d0] sm:$0xff]
    %v497 = vld [vmem:[#allocation7 + $0x3d8] sm:$0xff]
    %v498 = vld [vmem:[#allocation7 + $0x3e0] sm:$0xff]
    %v499 = vld [vmem:[#allocation7 + $0x3e8] sm:$0xff]
    %v500 = vld [vmem:[#allocation7 + $0x3f0] sm:$0xff]
    %v501 = vld [vmem:[#allocation7 + $0x3f8] sm:$0xff]
    %v502 = vld [vmem:[#allocation7 + $0x400] sm:$0xff]
    %v503 = vld [vmem:[#allocation7 + $0x408] sm:$0xff]
    %v504 = vld [vmem:[#allocation7 + $0x410] sm:$0xff]
    %v505 = vld [vmem:[#allocation7 + $0x418] sm:$0xff]
    %v506 = vld [vmem:[#allocation7 + $0x420] sm:$0xff]
    %v507 = vld [vmem:[#allocation7 + $0x428] sm:$0xff]
    %v508 = vld [vmem:[#allocation7 + $0x430] sm:$0xff]
    %v509 = vld [vmem:[#allocation7 + $0x438] sm:$0xff]
    %v510 = vld [vmem:[#allocation7 + $0x440] sm:$0xff]
    %v511 = vld [vmem:[#allocation7 + $0x448] sm:$0xff]
    %v512 = vld [vmem:[#allocation7 + $0x450] sm:$0xff]
    %v513 = vld [vmem:[#allocation7 + $0x458] sm:$0xff]
    %v514 = vld [vmem:[#allocation7 + $0x460] sm:$0xff]
    %v515 = vld [vmem:[#allocation7 + $0x468] sm:$0xff]
    %v516 = vld [vmem:[#allocation7 + $0x470] sm:$0xff]
    %v517 = vld [vmem:[#allocation7 + $0x478] sm:$0xff]
    %v518 = vld [vmem:[#allocation7 + $0x480] sm:$0xff]
    %v519 = vld [vmem:[#allocation7 + $0x488] sm:$0xff]
    %v520 = vld [vmem:[#allocation7 + $0x490] sm:$0xff]
    %v521 = vld [vmem:[#allocation7 + $0x498] sm:$0xff]
    %v522 = vld [vmem:[#allocation7 + $0x4a0] sm:$0xff]
    %v523 = vld [vmem:[#allocation7 + $0x4a8] sm:$0xff]
    %v524 = vld [vmem:[#allocation7 + $0x4b0] sm:$0xff]
    %v525 = vld [vmem:[#allocation7 + $0x4b8] sm:$0xff]
    %v526 = vld [vmem:[#allocation7 + $0x4c0] sm:$0xff]
    %v527 = vld [vmem:[#allocation7 + $0x4c8] sm:$0xff]
    %v528 = vld [vmem:[#allocation7 + $0x4d0] sm:$0xff]
    %v529 = vld [vmem:[#allocation7 + $0x4d8] sm:$0xff]
    %v530 = vld [vmem:[#allocation7 + $0x4e0] sm:$0xff]
    %v531 = vld [vmem:[#allocation7 + $0x4e8] sm:$0xff]
    %v532 = vld [vmem:[#allocation7 + $0x4f0] sm:$0xff]
    %v533 = vld [vmem:[#allocation7 + $0x4f8] sm:$0xff]
    %v534 = vld [vmem:[#allocation7 + $0x500] sm:$0xff]
    %v535 = vld [vmem:[#allocation7 + $0x508] sm:$0xff]
    %v536 = vld [vmem:[#allocation7 + $0x510] sm:$0xff]
    %v537 = vld [vmem:[#allocation7 + $0x518] sm:$0xff]
    %v538 = vld [vmem:[#allocation7 + $0x520] sm:$0xff]
    %v539 = vld [vmem:[#allocation7 + $0x528] sm:$0xff]
    %v540 = vld [vmem:[#allocation7 + $0x530] sm:$0xff]
    %v541 = vld [vmem:[#allocation7 + $0x538] sm:$0xff]
    %v542 = vld [vmem:[#allocation7 + $0x540] sm:$0xff]
    %v543 = vld [vmem:[#allocation7 + $0x548] sm:$0xff]
    %v544 = vld [vmem:[#allocation7 + $0x550] sm:$0xff]
    %v545 = vld [vmem:[#allocation7 + $0x558] sm:$0xff]
    %v546 = vld [vmem:[#allocation7 + $0x560] sm:$0xff]
    %v547 = vld [vmem:[#allocation7 + $0x568] sm:$0xff]
    %v548 = vld [vmem:[#allocation7 + $0x570] sm:$0xff]
    %v549 = vld [vmem:[#allocation7 + $0x578] sm:$0xff]
    %v550 = vld [vmem:[#allocation7 + $0x580] sm:$0xff]
    %v551 = vld [vmem:[#allocation7 + $0x588] sm:$0xff]
    %v552 = vld [vmem:[#allocation7 + $0x590] sm:$0xff]
    %v553 = vld [vmem:[#allocation7 + $0x598] sm:$0xff]
    %v554 = vld [vmem:[#allocation7 + $0x5a0] sm:$0xff]
    %v555 = vld [vmem:[#allocation7 + $0x5a8] sm:$0xff]
    %v556 = vld [vmem:[#allocation7 + $0x5b0] sm:$0xff]
    %v557 = vld [vmem:[#allocation7 + $0x5b8] sm:$0xff]
    %v558 = vld [vmem:[#allocation7 + $0x5c0] sm:$0xff]
    %v559 = vld [vmem:[#allocation7 + $0x5c8] sm:$0xff]
    %v560 = vld [vmem:[#allocation7 + $0x5d0] sm:$0xff]
    %v561 = vld [vmem:[#allocation7 + $0x5d8] sm:$0xff]
    %v562 = vld [vmem:[#allocation7 + $0x5e0] sm:$0xff]
    %v563 = vld [vmem:[#allocation7 + $0x5e8] sm:$0xff]
    %v564 = vld [vmem:[#allocation7 + $0x5f0] sm:$0xff]
    %v565 = vld [vmem:[#allocation7 + $0x5f8] sm:$0xff]
    %v566 = vld [vmem:[#allocation8] sm:$0xff]
    %v567 = vld [vmem:[#allocation8 + $0x8] sm:$0xff]
    %v568 = vld [vmem:[#allocation8 + $0x10] sm:$0xff]
    %v569 = vld [vmem:[#allocation8 + $0x18] sm:$0xff]
    %v570 = vld [vmem:[#allocation8 + $0x20] sm:$0xff]
    %v571 = vld [vmem:[#allocation8 + $0x28] sm:$0xff]
    %v572 = vld [vmem:[#allocation8 + $0x30] sm:$0xff]
    %v573 = vld [vmem:[#allocation8 + $0x38] sm:$0xff]
    %v574 = vld [vmem:[#allocation8 + $0x40] sm:$0xff]
    %v575 = vld [vmem:[#allocation8 + $0x48] sm:$0xff]
    %v576 = vld [vmem:[#allocation8 + $0x50] sm:$0xff]
    %v577 = vld [vmem:[#allocation8 + $0x58] sm:$0xff]
    %v578 = vld [vmem:[#allocation8 + $0x60] sm:$0xff]
    %v579 = vld [vmem:[#allocation8 + $0x68] sm:$0xff]
    %v580 = vld [vmem:[#allocation8 + $0x70] sm:$0xff]
    %v581 = vld [vmem:[#allocation8 + $0x78] sm:$0xff]
    %v582 = vld [vmem:[#allocation8 + $0x80] sm:$0xff]
    %v583 = vld [vmem:[#allocation8 + $0x88] sm:$0xff]
    %v584 = vld [vmem:[#allocation8 + $0x90] sm:$0xff]
    %v585 = vld [vmem:[#allocation8 + $0x98] sm:$0xff]
    %v586 = vld [vmem:[#allocation8 + $0xa0] sm:$0xff]
    %v587 = vld [vmem:[#allocation8 + $0xa8] sm:$0xff]
    %v588 = vld [vmem:[#allocation8 + $0xb0] sm:$0xff]
    %v589 = vld [vmem:[#allocation8 + $0xb8] sm:$0xff]
    %v590 = vld [vmem:[#allocation8 + $0xc0] sm:$0xff]
    %v591 = vld [vmem:[#allocation8 + $0xc8] sm:$0xff]
    %v592 = vld [vmem:[#allocation8 + $0xd0] sm:$0xff]
    %v593 = vld [vmem:[#allocation8 + $0xd8] sm:$0xff]
    %v594 = vld [vmem:[#allocation8 + $0xe0] sm:$0xff]
    %v595 = vld [vmem:[#allocation8 + $0xe8] sm:$0xff]
    %v596 = vld [vmem:[#allocation8 + $0xf0] sm:$0xff]
    %v597 = vld [vmem:[#allocation8 + $0xf8] sm:$0xff]
    %v598 = vld [vmem:[#allocation8 + $0x100] sm:$0xff]
    %v599 = vld [vmem:[#allocation8 + $0x108] sm:$0xff]
    %v600 = vld [vmem:[#allocation8 + $0x110] sm:$0xff]
    %v601 = vld [vmem:[#allocation8 + $0x118] sm:$0xff]
    %v602 = vld [vmem:[#allocation8 + $0x120] sm:$0xff]
    %v603 = vld [vmem:[#allocation8 + $0x128] sm:$0xff]
    %v604 = vld [vmem:[#allocation8 + $0x130] sm:$0xff]
    %v605 = vld [vmem:[#allocation8 + $0x138] sm:$0xff]
    %v606 = vld [vmem:[#allocation8 + $0x140] sm:$0xff]
    %v607 = vld [vmem:[#allocation8 + $0x148] sm:$0xff]
    %v608 = vld [vmem:[#allocation8 + $0x150] sm:$0xff]
    %v609 = vld [vmem:[#allocation8 + $0x158] sm:$0xff]
    %v610 = vld [vmem:[#allocation8 + $0x160] sm:$0xff]
    %v611 = vld [vmem:[#allocation8 + $0x168] sm:$0xff]
    %v612 = vld [vmem:[#allocation8 + $0x170] sm:$0xff]
    %v613 = vld [vmem:[#allocation8 + $0x178] sm:$0xff]
    %v614 = vld [vmem:[#allocation8 + $0x180] sm:$0xff]
    %v615 = vld [vmem:[#allocation8 + $0x188] sm:$0xff]
    %v616 = vld [vmem:[#allocation8 + $0x190] sm:$0xff]
    %v617 = vld [vmem:[#allocation8 + $0x198] sm:$0xff]
    %v618 = vld [vmem:[#allocation8 + $0x1a0] sm:$0xff]
    %v619 = vld [vmem:[#allocation8 + $0x1a8] sm:$0xff]
    %v620 = vld [vmem:[#allocation8 + $0x1b0] sm:$0xff]
    %v621 = vld [vmem:[#allocation8 + $0x1b8] sm:$0xff]
    %v622 = vld [vmem:[#allocation8 + $0x1c0] sm:$0xff]
    %v623 = vld [vmem:[#allocation8 + $0x1c8] sm:$0xff]
    %v624 = vld [vmem:[#allocation8 + $0x1d0] sm:$0xff]
    %v625 = vld [vmem:[#allocation8 + $0x1d8] sm:$0xff]
    %v626 = vld [vmem:[#allocation8 + $0x1e0] sm:$0xff]
    %v627 = vld [vmem:[#allocation8 + $0x1e8] sm:$0xff]
    %v628 = vld [vmem:[#allocation8 + $0x1f0] sm:$0xff]
    %v629 = vld [vmem:[#allocation8 + $0x1f8] sm:$0xff]
    %v630 = vld [vmem:[#allocation8 + $0x200] sm:$0xff]
    %v631 = vld [vmem:[#allocation8 + $0x208] sm:$0xff]
    %v632 = vld [vmem:[#allocation8 + $0x210] sm:$0xff]
    %v633 = vld [vmem:[#allocation8 + $0x218] sm:$0xff]
    %v634 = vld [vmem:[#allocation8 + $0x220] sm:$0xff]
    %v635 = vld [vmem:[#allocation8 + $0x228] sm:$0xff]
    %v636 = vld [vmem:[#allocation8 + $0x230] sm:$0xff]
    %v637 = vld [vmem:[#allocation8 + $0x238] sm:$0xff]
    %v638 = vld [vmem:[#allocation8 + $0x240] sm:$0xff]
    %v639 = vld [vmem:[#allocation8 + $0x248] sm:$0xff]
    %v640 = vld [vmem:[#allocation8 + $0x250] sm:$0xff]
    %v641 = vld [vmem:[#allocation8 + $0x258] sm:$0xff]
    %v642 = vld [vmem:[#allocation8 + $0x260] sm:$0xff]
    %v643 = vld [vmem:[#allocation8 + $0x268] sm:$0xff]
    %v644 = vld [vmem:[#allocation8 + $0x270] sm:$0xff]
    %v645 = vld [vmem:[#allocation8 + $0x278] sm:$0xff]
    %v646 = vld [vmem:[#allocation8 + $0x280] sm:$0xff]
    %v647 = vld [vmem:[#allocation8 + $0x288] sm:$0xff]
    %v648 = vld [vmem:[#allocation8 + $0x290] sm:$0xff]
    %v649 = vld [vmem:[#allocation8 + $0x298] sm:$0xff]
    %v650 = vld [vmem:[#allocation8 + $0x2a0] sm:$0xff]
    %v651 = vld [vmem:[#allocation8 + $0x2a8] sm:$0xff]
    %v652 = vld [vmem:[#allocation8 + $0x2b0] sm:$0xff]
    %v653 = vld [vmem:[#allocation8 + $0x2b8] sm:$0xff]
    %v654 = vld [vmem:[#allocation8 + $0x2c0] sm:$0xff]
    %v655 = vld [vmem:[#allocation8 + $0x2c8] sm:$0xff]
    %v656 = vld [vmem:[#allocation8 + $0x2d0] sm:$0xff]
    %v657 = vld [vmem:[#allocation8 + $0x2d8] sm:$0xff]
    %v658 = vld [vmem:[#allocation8 + $0x2e0] sm:$0xff]
    %v659 = vld [vmem:[#allocation8 + $0x2e8] sm:$0xff]
    %v660 = vld [vmem:[#allocation8 + $0x2f0] sm:$0xff]
    %v661 = vld [vmem:[#allocation8 + $0x2f8] sm:$0xff]
    %662 = vmatprep.subr.mxu0 %v612
    %663 = vmatpush1.msra.mxu0 %v611
    %664 = vmatprep.subr.mxu0 %v609
    %665 = vmatpush1.msra.mxu0 %v608
    %666 = vmatprep.subr.mxu0 %v606
    %667 = vmatpush1.msra.mxu0 %v605
    %668 = vmatprep.subr.mxu0 %v603
    %669 = vmatpush1.msra.mxu0 %v602
    %670 = vmatprep.subr.mxu0 %v600
    %671 = vmatpush1.msra.mxu0 %v599
    %672 = vmatprep.subr.mxu0 %v597
    %673 = vmatpush1.msra.mxu0 %v596
    %674 = vmatprep.subr.mxu0 %v594
    %675 = vmatpush1.msra.mxu0 %v593
    %676 = vmatprep.subr.mxu0 %v591
    %677 = vmatpush1.msra.mxu0 %v590
    %678 = vmatprep.subr.mxu0 %v588
    %679 = vmatpush1.msra.mxu0 %v587
    %680 = vmatprep.subr.mxu0 %v585
    %681 = vmatpush1.msra.mxu0 %v584
    %682 = vmatprep.subr.mxu0 %v582
    %683 = vmatpush1.msra.mxu0 %v581
    %684 = vmatprep.subr.mxu0 %v579
    %685 = vmatpush1.msra.mxu0 %v578
    %686 = vmatprep.subr.mxu0 %v576
    %687 = vmatpush1.msra.mxu0 %v575
    %688 = vmatprep.subr.mxu0 %v573
    %689 = vmatpush1.msra.mxu0 %v572
    %690 = vmatprep.subr.mxu0 %v570
    %691 = vmatpush1.msra.mxu0 %v569
    %692 = vmatprep.subr.mxu0 %v567
    %693 = vmatpush1.msra.mxu0 %v566
    %694 = vmatprep.subr.mxu0 %v660
    %695 = vmatpush2.msra.mxu0 %v659
    %696 = vmatprep.subr.mxu0 %v657
    %697 = vmatpush2.msra.mxu0 %v656
    %698 = vmatprep.subr.mxu0 %v654
    %699 = vmatpush2.msra.mxu0 %v653
    %700 = vmatprep.subr.mxu0 %v651
    %701 = vmatpush2.msra.mxu0 %v650
    %702 = vmatprep.subr.mxu0 %v648
    %703 = vmatpush2.msra.mxu0 %v647
    %704 = vmatprep.subr.mxu0 %v645
    %705 = vmatpush2.msra.mxu0 %v644
    %706 = vmatprep.subr.mxu0 %v642
    %707 = vmatpush2.msra.mxu0 %v641
    %708 = vmatprep.subr.mxu0 %v639
    %709 = vmatpush2.msra.mxu0 %v638
    %710 = vmatprep.subr.mxu0 %v636
    %711 = vmatpush2.msra.mxu0 %v635
    %712 = vmatprep.subr.mxu0 %v633
    %713 = vmatpush2.msra.mxu0 %v632
    %714 = vmatprep.subr.mxu0 %v630
    %715 = vmatpush2.msra.mxu0 %v629
    %716 = vmatprep.subr.mxu0 %v627
    %717 = vmatpush2.msra.mxu0 %v626
    %718 = vmatprep.subr.mxu0 %v624
    %719 = vmatpush2.msra.mxu0 %v623
    %720 = vmatprep.subr.mxu0 %v621
    %721 = vmatpush2.msra.mxu0 %v620
    %722 = vmatprep.subr.mxu0 %v618
    %723 = vmatpush2.msra.mxu0 %v617
    %724 = vmatprep.subr.mxu0 %v615
    %725 = vmatpush2.msra.mxu0 %v614
    %726 = vmatprep.mubr.f32.mxu0 %v91
    %727 = vmatmul.mubr.f32.gmra.mxu0 %v90
    %v728 = vpop.f32.mrf.mxu0
    %v729 = vadd.f32 0.0, %v728
    %v730 = vpop.f32.mrf.mxu0
    %v731 = vadd.f32 0.0, %v730
    %732 = vdwg.mxu0
    %733 = vmatprep.subr.mxu0 0.0
    %734 = vmatpush1.msra.mxu0 %v613
    %735 = vmatprep.subr.mxu0 0.0
    %736 = vmatpush1.msra.mxu0 %v610
    %737 = vmatprep.subr.mxu0 0.0
    %738 = vmatpush1.msra.mxu0 %v607
    %739 = vmatprep.subr.mxu0 0.0
    %740 = vmatpush1.msra.mxu0 %v604
    %741 = vmatprep.subr.mxu0 0.0
    %742 = vmatpush1.msra.mxu0 %v601
    %743 = vmatprep.subr.mxu0 0.0
    %744 = vmatpush1.msra.mxu0 %v598
    %745 = vmatprep.subr.mxu0 0.0
    %746 = vmatpush1.msra.mxu0 %v595
    %747 = vmatprep.subr.mxu0 0.0
    %748 = vmatpush1.msra.mxu0 %v592
    %749 = vmatprep.subr.mxu0 0.0
    %750 = vmatpush1.msra.mxu0 %v589
    %751 = vmatprep.subr.mxu0 0.0
    %752 = vmatpush1.msra.mxu0 %v586
    %753 = vmatprep.subr.mxu0 0.0
    %754 = vmatpush1.msra.mxu0 %v583
    %755 = vmatprep.subr.mxu0 0.0
    %756 = vmatpush1.msra.mxu0 %v580
    %757 = vmatprep.subr.mxu0 0.0
    %758 = vmatpush1.msra.mxu0 %v577
    %759 = vmatprep.subr.mxu0 0.0
    %760 = vmatpush1.msra.mxu0 %v574
    %761 = vmatprep.subr.mxu0 0.0
    %762 = vmatpush1.msra.mxu0 %v571
    %763 = vmatprep.subr.mxu0 0.0
    %764 = vmatpush1.msra.mxu0 %v568
    %765 = vmatprep.subr.mxu0 0.0
    %766 = vmatpush2.msra.mxu0 %v661
    %767 = vmatprep.subr.mxu0 0.0
    %768 = vmatpush2.msra.mxu0 %v658
    %769 = vmatprep.subr.mxu0 0.0
    %770 = vmatpush2.msra.mxu0 %v655
    %771 = vmatprep.subr.mxu0 0.0
    %772 = vmatpush2.msra.mxu0 %v652
    %773 = vmatprep.subr.mxu0 0.0
    %774 = vmatpush2.msra.mxu0 %v649
    %775 = vmatprep.subr.mxu0 0.0
    %776 = vmatpush2.msra.mxu0 %v646
    %777 = vmatprep.subr.mxu0 0.0
    %778 = vmatpush2.msra.mxu0 %v643
    %779 = vmatprep.subr.mxu0 0.0
    %780 = vmatpush2.msra.mxu0 %v640
    %781 = vmatprep.subr.mxu0 0.0
    %782 = vmatpush2.msra.mxu0 %v637
    %783 = vmatprep.subr.mxu0 0.0
    %784 = vmatpush2.msra.mxu0 %v634
    %785 = vmatprep.subr.mxu0 0.0
    %786 = vmatpush2.msra.mxu0 %v631
    %787 = vmatprep.subr.mxu0 0.0
    %788 = vmatpush2.msra.mxu0 %v628
    %789 = vmatprep.subr.mxu0 0.0
    %790 = vmatpush2.msra.mxu0 %v625
    %791 = vmatprep.subr.mxu0 0.0
    %792 = vmatpush2.msra.mxu0 %v622
    %793 = vmatprep.subr.mxu0 0.0
    %794 = vmatpush2.msra.mxu0 %v619
    %795 = vmatprep.subr.mxu0 0.0
    %796 = vmatpush2.msra.mxu0 %v616
    %797 = vmatprep.mubr.f32.mxu0 %v91
    %798 = vmatmul.mubr.f32.gmra.mxu0 %v90
    %v799 = vpop.f32.mrf.mxu0
    %v800 = vadd.f32 0.0, %v799
    %v801 = vpop.f32.mrf.mxu0
    %802 = vdwg.mxu0
    %803 = vmatprep.subr.mxu0 %v420
    %804 = vmatpush1.msra.mxu0 %v419
    %805 = vmatprep.subr.mxu0 %v417
    %806 = vmatpush1.msra.mxu0 %v416
    %807 = vmatprep.subr.mxu0 %v414
    %808 = vmatpush1.msra.mxu0 %v413
    %809 = vmatprep.subr.mxu0 %v411
    %810 = vmatpush1.msra.mxu0 %v410
    %811 = vmatprep.subr.mxu0 %v408
    %812 = vmatpush1.msra.mxu0 %v407
    %813 = vmatprep.subr.mxu0 %v405
    %814 = vmatpush1.msra.mxu0 %v404
    %815 = vmatprep.subr.mxu0 %v402
    %816 = vmatpush1.msra.mxu0 %v401
    %817 = vmatprep.subr.mxu0 %v399
    %818 = vmatpush1.msra.mxu0 %v398
    %819 = vmatprep.subr.mxu0 %v396
    %820 = vmatpush1.msra.mxu0 %v395
    %821 = vmatprep.subr.mxu0 %v393
    %822 = vmatpush1.msra.mxu0 %v392
    %823 = vmatprep.subr.mxu0 %v390
    %824 = vmatpush1.msra.mxu0 %v389
    %825 = vmatprep.subr.mxu0 %v387
    %826 = vmatpush1.msra.mxu0 %v386
    %827 = vmatprep.subr.mxu0 %v384
    %828 = vmatpush1.msra.mxu0 %v383
    %829 = vmatprep.subr.mxu0 %v381
    %830 = vmatpush1.msra.mxu0 %v380
    %831 = vmatprep.subr.mxu0 %v378
    %832 = vmatpush1.msra.mxu0 %v377
    %833 = vmatprep.subr.mxu0 %v375
    %834 = vmatpush1.msra.mxu0 %v374
    %835 = vmatprep.subr.mxu0 %v468
    %836 = vmatpush2.msra.mxu0 %v467
    %837 = vmatprep.subr.mxu0 %v465
    %838 = vmatpush2.msra.mxu0 %v464
    %839 = vmatprep.subr.mxu0 %v462
    %840 = vmatpush2.msra.mxu0 %v461
    %841 = vmatprep.subr.mxu0 %v459
    %842 = vmatpush2.msra.mxu0 %v458
    %843 = vmatprep.subr.mxu0 %v456
    %844 = vmatpush2.msra.mxu0 %v455
    %845 = vmatprep.subr.mxu0 %v453
    %846 = vmatpush2.msra.mxu0 %v452
    %847 = vmatprep.subr.mxu0 %v450
    %848 = vmatpush2.msra.mxu0 %v449
    %849 = vmatprep.subr.mxu0 %v447
    %850 = vmatpush2.msra.mxu0 %v446
    %851 = vmatprep.subr.mxu0 %v444
    %852 = vmatpush2.msra.mxu0 %v443
    %853 = vmatprep.subr.mxu0 %v441
    %854 = vmatpush2.msra.mxu0 %v440
    %855 = vmatprep.subr.mxu0 %v438
    %856 = vmatpush2.msra.mxu0 %v437
    %857 = vmatprep.subr.mxu0 %v435
    %858 = vmatpush2.msra.mxu0 %v434
    %859 = vmatprep.subr.mxu0 %v432
    %860 = vmatpush2.msra.mxu0 %v431
    %861 = vmatprep.subr.mxu0 %v429
    %862 = vmatpush2.msra.mxu0 %v428
    %863 = vmatprep.subr.mxu0 %v426
    %864 = vmatpush2.msra.mxu0 %v425
    %865 = vmatprep.subr.mxu0 %v423
    %866 = vmatpush2.msra.mxu0 %v422
    %867 = vmatprep.mubr.f32.mxu0 %v371
    %868 = vmatmul.mubr.f32.gmra.mxu0 %v370
    %v869 = vpop.f32.mrf.mxu0
    %v870 = vadd.f32 %v729, %v869
    %v871 = vpop.f32.mrf.mxu0
    %v872 = vadd.f32 %v731, %v871
    %873 = vdwg.mxu0
    %874 = vmatprep.subr.mxu0 %v516
    %875 = vmatpush1.msra.mxu0 %v515
    %876 = vmatprep.subr.mxu0 %v513
    %877 = vmatpush1.msra.mxu0 %v512
    %878 = vmatprep.subr.mxu0 %v510
    %879 = vmatpush1.msra.mxu0 %v509
    %880 = vmatprep.subr.mxu0 %v507
    %881 = vmatpush1.msra.mxu0 %v506
    %882 = vmatprep.subr.mxu0 %v504
    %883 = vmatpush1.msra.mxu0 %v503
    %884 = vmatprep.subr.mxu0 %v501
    %885 = vmatpush1.msra.mxu0 %v500
    %886 = vmatprep.subr.mxu0 %v498
    %887 = vmatpush1.msra.mxu0 %v497
    %888 = vmatprep.subr.mxu0 %v495
    %889 = vmatpush1.msra.mxu0 %v494
    %890 = vmatprep.subr.mxu0 %v492
    %891 = vmatpush1.msra.mxu0 %v491
    %892 = vmatprep.subr.mxu0 %v489
    %893 = vmatpush1.msra.mxu0 %v488
    %894 = vmatprep.subr.mxu0 %v486
    %895 = vmatpush1.msra.mxu0 %v485
    %896 = vmatprep.subr.mxu0 %v483
    %897 = vmatpush1.msra.mxu0 %v482
    %898 = vmatprep.subr.mxu0 %v480
    %899 = vmatpush1.msra.mxu0 %v479
    %900 = vmatprep.subr.mxu0 %v477
    %901 = vmatpush1.msra.mxu0 %v476
    %902 = vmatprep.subr.mxu0 %v474
    %903 = vmatpush1.msra.mxu0 %v473
    %904 = vmatprep.subr.mxu0 %v471
    %905 = vmatpush1.msra.mxu0 %v470
    %906 = vmatprep.subr.mxu0 %v564
    %907 = vmatpush2.msra.mxu0 %v563
    %908 = vmatprep.subr.mxu0 %v561
    %909 = vmatpush2.msra.mxu0 %v560
    %910 = vmatprep.subr.mxu0 %v558
    %911 = vmatpush2.msra.mxu0 %v557
    %912 = vmatprep.subr.mxu0 %v555
    %913 = vmatpush2.msra.mxu0 %v554
    %914 = vmatprep.subr.mxu0 %v552
    %915 = vmatpush2.msra.mxu0 %v551
    %916 = vmatprep.subr.mxu0 %v549
    %917 = vmatpush2.msra.mxu0 %v548
    %918 = vmatprep.subr.mxu0 %v546
    %919 = vmatpush2.msra.mxu0 %v545
    %920 = vmatprep.subr.mxu0 %v543
    %921 = vmatpush2.msra.mxu0 %v542
    %922 = vmatprep.subr.mxu0 %v540
    %923 = vmatpush2.msra.mxu0 %v539
    %924 = vmatprep.subr.mxu0 %v537
    %925 = vmatpush2.msra.mxu0 %v536
    %926 = vmatprep.subr.mxu0 %v534
    %927 = vmatpush2.msra.mxu0 %v533
    %928 = vmatprep.subr.mxu0 %v531
    %929 = vmatpush2.msra.mxu0 %v530
    %930 = vmatprep.subr.mxu0 %v528
    %931 = vmatpush2.msra.mxu0 %v527
    %932 = vmatprep.subr.mxu0 %v525
    %933 = vmatpush2.msra.mxu0 %v524
    %934 = vmatprep.subr.mxu0 %v522
    %935 = vmatpush2.msra.mxu0 %v521
    %936 = vmatprep.subr.mxu0 %v519
    %937 = vmatpush2.msra.mxu0 %v518
    %938 = vmatprep.mubr.f32.mxu0 %v373
    %939 = vmatmul.mubr.f32.gmra.mxu0 %v372
    %v940 = vpop.f32.mrf.mxu0
    %v941 = vadd.f32 %v870, %v940
    %v942 = vpop.f32.mrf.mxu0
    %v943 = vadd.f32 %v872, %v942
    %944 = vdwg.mxu0
    %945 = vmatprep.subr.mxu0 0.0
    %946 = vmatpush1.msra.mxu0 %v421
    %947 = vmatprep.subr.mxu0 0.0
    %948 = vmatpush1.msra.mxu0 %v418
    %949 = vmatprep.subr.mxu0 0.0
    %950 = vmatpush1.msra.mxu0 %v415
    %951 = vmatprep.subr.mxu0 0.0
    %952 = vmatpush1.msra.mxu0 %v412
    %953 = vmatprep.subr.mxu0 0.0
    %954 = vmatpush1.msra.mxu0 %v409
    %955 = vmatprep.subr.mxu0 0.0
    %956 = vmatpush1.msra.mxu0 %v406
    %957 = vmatprep.subr.mxu0 0.0
    %958 = vmatpush1.msra.mxu0 %v403
    %959 = vmatprep.subr.mxu0 0.0
    %960 = vmatpush1.msra.mxu0 %v400
    %961 = vmatprep.subr.mxu0 0.0
    %962 = vmatpush1.msra.mxu0 %v397
    %963 = vmatprep.subr.mxu0 0.0
    %964 = vmatpush1.msra.mxu0 %v394
    %965 = vmatprep.subr.mxu0 0.0
    %966 = vmatpush1.msra.mxu0 %v391
    %967 = vmatprep.subr.mxu0 0.0
    %968 = vmatpush1.msra.mxu0 %v388
    %969 = vmatprep.subr.mxu0 0.0
    %970 = vmatpush1.msra.mxu0 %v385
    %971 = vmatprep.subr.mxu0 0.0
    %972 = vmatpush1.msra.mxu0 %v382
    %973 = vmatprep.subr.mxu0 0.0
    %974 = vmatpush1.msra.mxu0 %v379
    %975 = vmatprep.subr.mxu0 0.0
    %976 = vmatpush1.msra.mxu0 %v376
    %977 = vmatprep.subr.mxu0 0.0
    %978 = vmatpush2.msra.mxu0 %v469
    %979 = vmatprep.subr.mxu0 0.0
    %980 = vmatpush2.msra.mxu0 %v466
    %981 = vmatprep.subr.mxu0 0.0
    %982 = vmatpush2.msra.mxu0 %v463
    %983 = vmatprep.subr.mxu0 0.0
    %984 = vmatpush2.msra.mxu0 %v460
    %985 = vmatprep.subr.mxu0 0.0
    %986 = vmatpush2.msra.mxu0 %v457
    %987 = vmatprep.subr.mxu0 0.0
    %988 = vmatpush2.msra.mxu0 %v454
    %989 = vmatprep.subr.mxu0 0.0
    %990 = vmatpush2.msra.mxu0 %v451
    %991 = vmatprep.subr.mxu0 0.0
    %992 = vmatpush2.msra.mxu0 %v448
    %993 = vmatprep.subr.mxu0 0.0
    %994 = vmatpush2.msra.mxu0 %v445
    %995 = vmatprep.subr.mxu0 0.0
    %996 = vmatpush2.msra.mxu0 %v442
    %997 = vmatprep.subr.mxu0 0.0
    %998 = vmatpush2.msra.mxu0 %v439
    %999 = vmatprep.subr.mxu0 0.0
    %1000 = vmatpush2.msra.mxu0 %v436
    %1001 = vmatprep.subr.mxu0 0.0
    %1002 = vmatpush2.msra.mxu0 %v433
    %1003 = vmatprep.subr.mxu0 0.0
    %1004 = vmatpush2.msra.mxu0 %v430
    %1005 = vmatprep.subr.mxu0 0.0
    %1006 = vmatpush2.msra.mxu0 %v427
    %1007 = vmatprep.subr.mxu0 0.0
    %1008 = vmatpush2.msra.mxu0 %v424
    %1009 = vmatprep.mubr.f32.mxu0 %v371
    %1010 = vmatmul.mubr.f32.gmra.mxu0 %v370
    %v1011 = vpop.f32.mrf.mxu0
    %v1012 = vadd.f32 %v800, %v1011
    %v1013 = vpop.f32.mrf.mxu0
    %1014 = vdwg.mxu0
    %1015 = vmatprep.subr.mxu0 0.0
    %1016 = vmatpush1.msra.mxu0 %v517
    %1017 = vmatprep.subr.mxu0 0.0
    %1018 = vmatpush1.msra.mxu0 %v514
    %1019 = vmatprep.subr.mxu0 0.0
    %1020 = vmatpush1.msra.mxu0 %v511
    %1021 = vmatprep.subr.mxu0 0.0
    %1022 = vmatpush1.msra.mxu0 %v508
    %1023 = vmatprep.subr.mxu0 0.0
    %1024 = vmatpush1.msra.mxu0 %v505
    %1025 = vmatprep.subr.mxu0 0.0
    %1026 = vmatpush1.msra.mxu0 %v502
    %1027 = vmatprep.subr.mxu0 0.0
    %1028 = vmatpush1.msra.mxu0 %v499
    %1029 = vmatprep.subr.mxu0 0.0
    %1030 = vmatpush1.msra.mxu0 %v496
    %1031 = vmatprep.subr.mxu0 0.0
    %1032 = vmatpush1.msra.mxu0 %v493
    %1033 = vmatprep.subr.mxu0 0.0
    %1034 = vmatpush1.msra.mxu0 %v490
    %1035 = vmatprep.subr.mxu0 0.0
    %1036 = vmatpush1.msra.mxu0 %v487
    %1037 = vmatprep.subr.mxu0 0.0
    %1038 = vmatpush1.msra.mxu0 %v484
    %1039 = vmatprep.subr.mxu0 0.0
    %1040 = vmatpush1.msra.mxu0 %v481
    %1041 = vmatprep.subr.mxu0 0.0
    %1042 = vmatpush1.msra.mxu0 %v478
    %1043 = vmatprep.subr.mxu0 0.0
    %1044 = vmatpush1.msra.mxu0 %v475
    %1045 = vmatprep.subr.mxu0 0.0
    %1046 = vmatpush1.msra.mxu0 %v472
    %1047 = vmatprep.subr.mxu0 0.0
    %1048 = vmatpush2.msra.mxu0 %v565
    %1049 = vmatprep.subr.mxu0 0.0
    %1050 = vmatpush2.msra.mxu0 %v562
    %1051 = vmatprep.subr.mxu0 0.0
    %1052 = vmatpush2.msra.mxu0 %v559
    %1053 = vmatprep.subr.mxu0 0.0
    %1054 = vmatpush2.msra.mxu0 %v556
    %1055 = vmatprep.subr.mxu0 0.0
    %1056 = vmatpush2.msra.mxu0 %v553
    %1057 = vmatprep.subr.mxu0 0.0
    %1058 = vmatpush2.msra.mxu0 %v550
    %1059 = vmatprep.subr.mxu0 0.0
    %1060 = vmatpush2.msra.mxu0 %v547
    %1061 = vmatprep.subr.mxu0 0.0
    %1062 = vmatpush2.msra.mxu0 %v544
    %1063 = vmatprep.subr.mxu0 0.0
    %1064 = vmatpush2.msra.mxu0 %v541
    %1065 = vmatprep.subr.mxu0 0.0
    %1066 = vmatpush2.msra.mxu0 %v538
    %1067 = vmatprep.subr.mxu0 0.0
    %1068 = vmatpush2.msra.mxu0 %v535
    %1069 = vmatprep.subr.mxu0 0.0
    %1070 = vmatpush2.msra.mxu0 %v532
    %1071 = vmatprep.subr.mxu0 0.0
    %1072 = vmatpush2.msra.mxu0 %v529
    %1073 = vmatprep.subr.mxu0 0.0
    %1074 = vmatpush2.msra.mxu0 %v526
    %1075 = vmatprep.subr.mxu0 0.0
    %1076 = vmatpush2.msra.mxu0 %v523
    %1077 = vmatprep.subr.mxu0 0.0
    %1078 = vmatpush2.msra.mxu0 %v520
    %1079 = vmatprep.mubr.f32.mxu0 %v373
    %1080 = vmatmul.mubr.f32.gmra.mxu0 %v372
    %v1081 = vpop.f32.mrf.mxu0
    %v1082 = vadd.f32 %v1012, %v1081
    %v1083 = vpop.f32.mrf.mxu0
    %1084 = vdwg.mxu0
    %vm1085 = vcmp.gt.f32.partialorder %v941, 0.0
    %vm1086 = vcmp.gt.f32.partialorder %v943, 0.0
    %vm1087 = vcmp.gt.f32.partialorder %v1082, 0.0
    %v1088 = vmul.f32 %v941, 0.01
    %v1089 = vmul.f32 %v943, 0.01
    %v1090 = vmul.f32 %v1082, 0.01
    %v1091 = vsel %vm1085, %v941, %v1088
    %v1092 = vsel %vm1086, %v943, %v1089
    %v1093 = vsel %vm1087, %v1082, %v1090
    %v1094 = vld [vmem:[#allocation10] sm:$0xff]
    %v1095 = vld [vmem:[#allocation10 + $0x8] sm:$0xff]
    %v1096 = vld [vmem:[#allocation10 + $0x10] sm:$0xff]
    %v1097 = vld [vmem:[#allocation10 + $0x18] sm:$0xff]
    %v1098 = vld [vmem:[#allocation10 + $0x20] sm:$0xff]
    %v1099 = vld [vmem:[#allocation10 + $0x28] sm:$0xff]
    %v1100 = vld [vmem:[#allocation10 + $0x30] sm:$0xff]
    %v1101 = vld [vmem:[#allocation10 + $0x38] sm:$0xff]
    %v1102 = vld [vmem:[#allocation10 + $0x40] sm:$0xff]
    %v1103 = vld [vmem:[#allocation10 + $0x48] sm:$0xff]
    %v1104 = vld [vmem:[#allocation10 + $0x50] sm:$0xff]
    %v1105 = vld [vmem:[#allocation10 + $0x58] sm:$0xff]
    %v1106 = vld [vmem:[#allocation10 + $0x60] sm:$0xff]
    %v1107 = vld [vmem:[#allocation10 + $0x68] sm:$0xff]
    %v1108 = vld [vmem:[#allocation10 + $0x70] sm:$0xff]
    %v1109 = vld [vmem:[#allocation10 + $0x78] sm:$0xff]
    %v1110 = vld [vmem:[#allocation10 + $0x80] sm:$0xff]
    %v1111 = vld [vmem:[#allocation10 + $0x88] sm:$0xff]
    %v1112 = vld [vmem:[#allocation10 + $0x90] sm:$0xff]
    %v1113 = vld [vmem:[#allocation10 + $0x98] sm:$0xff]
    %v1114 = vld [vmem:[#allocation10 + $0xa0] sm:$0xff]
    %v1115 = vld [vmem:[#allocation10 + $0xa8] sm:$0xff]
    %v1116 = vld [vmem:[#allocation10 + $0xb0] sm:$0xff]
    %v1117 = vld [vmem:[#allocation10 + $0xb8] sm:$0xff]
    %v1118 = vld [vmem:[#allocation10 + $0xc0] sm:$0xff]
    %v1119 = vld [vmem:[#allocation10 + $0xc8] sm:$0xff]
    %v1120 = vld [vmem:[#allocation10 + $0xd0] sm:$0xff]
    %v1121 = vld [vmem:[#allocation10 + $0xd8] sm:$0xff]
    %v1122 = vld [vmem:[#allocation10 + $0xe0] sm:$0xff]
    %v1123 = vld [vmem:[#allocation10 + $0xe8] sm:$0xff]
    %v1124 = vld [vmem:[#allocation10 + $0xf0] sm:$0xff]
    %v1125 = vld [vmem:[#allocation10 + $0xf8] sm:$0xff]
    %v1126 = vld [vmem:[#allocation10 + $0x100] sm:$0xff]
    %v1127 = vld [vmem:[#allocation10 + $0x108] sm:$0xff]
    %v1128 = vld [vmem:[#allocation10 + $0x110] sm:$0xff]
    %v1129 = vld [vmem:[#allocation10 + $0x118] sm:$0xff]
    %v1130 = vld [vmem:[#allocation10 + $0x120] sm:$0xff]
    %v1131 = vld [vmem:[#allocation10 + $0x128] sm:$0xff]
    %v1132 = vld [vmem:[#allocation10 + $0x130] sm:$0xff]
    %v1133 = vld [vmem:[#allocation10 + $0x138] sm:$0xff]
    %v1134 = vld [vmem:[#allocation10 + $0x140] sm:$0xff]
    %v1135 = vld [vmem:[#allocation10 + $0x148] sm:$0xff]
    %v1136 = vld [vmem:[#allocation10 + $0x150] sm:$0xff]
    %v1137 = vld [vmem:[#allocation10 + $0x158] sm:$0xff]
    %v1138 = vld [vmem:[#allocation10 + $0x160] sm:$0xff]
    %v1139 = vld [vmem:[#allocation10 + $0x168] sm:$0xff]
    %v1140 = vld [vmem:[#allocation10 + $0x170] sm:$0xff]
    %v1141 = vld [vmem:[#allocation10 + $0x178] sm:$0xff]
    %v1142 = vld [vmem:[%s5] sm:$0x1]
    %v1144 = vlaneseq
    %v1145 = vshrl.u32 %v1144, 7
    %v1146 = vsub.s32 0, %v1145
    %v1147 = vrot.slane %v1142, %v1146
    %1149 = vmatprep.subr.mxu0 0.0
    %1150 = vmatpush1.msra.mxu0 %v1109
    %1151 = vmatprep.subr.mxu0 0.0
    %1152 = vmatpush1.msra.mxu0 %v1108
    %1153 = vmatprep.subr.mxu0 0.0
    %1154 = vmatpush1.msra.mxu0 %v1107
    %1155 = vmatprep.subr.mxu0 0.0
    %1156 = vmatpush1.msra.mxu0 %v1106
    %1157 = vmatprep.subr.mxu0 0.0
    %1158 = vmatpush1.msra.mxu0 %v1105
    %1159 = vmatprep.subr.mxu0 0.0
    %1160 = vmatpush1.msra.mxu0 %v1104
    %1161 = vmatprep.subr.mxu0 0.0
    %1162 = vmatpush1.msra.mxu0 %v1103
    %1163 = vmatprep.subr.mxu0 0.0
    %1164 = vmatpush1.msra.mxu0 %v1102
    %1165 = vmatprep.subr.mxu0 0.0
    %1166 = vmatpush1.msra.mxu0 %v1101
    %1167 = vmatprep.subr.mxu0 0.0
    %1168 = vmatpush1.msra.mxu0 %v1100
    %1169 = vmatprep.subr.mxu0 0.0
    %1170 = vmatpush1.msra.mxu0 %v1099
    %1171 = vmatprep.subr.mxu0 0.0
    %1172 = vmatpush1.msra.mxu0 %v1098
    %1173 = vmatprep.subr.mxu0 0.0
    %1174 = vmatpush1.msra.mxu0 %v1097
    %1175 = vmatprep.subr.mxu0 0.0
    %1176 = vmatpush1.msra.mxu0 %v1096
    %1177 = vmatprep.subr.mxu0 0.0
    %1178 = vmatpush1.msra.mxu0 %v1095
    %1179 = vmatprep.subr.mxu0 0.0
    %1180 = vmatpush1.msra.mxu0 %v1094
    %1181 = vmatprep.subr.mxu0 0.0
    %1182 = vmatpush2.msra.mxu0 %v1125
    %1183 = vmatprep.subr.mxu0 0.0
    %1184 = vmatpush2.msra.mxu0 %v1124
    %1185 = vmatprep.subr.mxu0 0.0
    %1186 = vmatpush2.msra.mxu0 %v1123
    %1187 = vmatprep.subr.mxu0 0.0
    %1188 = vmatpush2.msra.mxu0 %v1122
    %1189 = vmatprep.subr.mxu0 0.0
    %1190 = vmatpush2.msra.mxu0 %v1121
    %1191 = vmatprep.subr.mxu0 0.0
    %1192 = vmatpush2.msra.mxu0 %v1120
    %1193 = vmatprep.subr.mxu0 0.0
    %1194 = vmatpush2.msra.mxu0 %v1119
    %1195 = vmatprep.subr.mxu0 0.0
    %1196 = vmatpush2.msra.mxu0 %v1118
    %1197 = vmatprep.subr.mxu0 0.0
    %1198 = vmatpush2.msra.mxu0 %v1117
    %1199 = vmatprep.subr.mxu0 0.0
    %1200 = vmatpush2.msra.mxu0 %v1116
    %1201 = vmatprep.subr.mxu0 0.0
    %1202 = vmatpush2.msra.mxu0 %v1115
    %1203 = vmatprep.subr.mxu0 0.0
    %1204 = vmatpush2.msra.mxu0 %v1114
    %1205 = vmatprep.subr.mxu0 0.0
    %1206 = vmatpush2.msra.mxu0 %v1113
    %1207 = vmatprep.subr.mxu0 0.0
    %1208 = vmatpush2.msra.mxu0 %v1112
    %1209 = vmatprep.subr.mxu0 0.0
    %1210 = vmatpush2.msra.mxu0 %v1111
    %1211 = vmatprep.subr.mxu0 0.0
    %1212 = vmatpush2.msra.mxu0 %v1110
    %1213 = vmatprep.mubr.f32.mxu0 %v1092
    %1214 = vmatmul.mubr.f32.gmra.mxu0 %v1091
    %v1215 = vpop.f32.mrf.mxu0
    %v1216 = vadd.f32 %v1147, %v1215
    %v1217 = vpop.f32.mrf.mxu0
    %1218 = vdwg.mxu0
    %1219 = vmatprep.subr.mxu0 0.0
    %1220 = vmatpush1.msra.mxu0 %v1141
    %1221 = vmatprep.subr.mxu0 0.0
    %1222 = vmatpush1.msra.mxu0 %v1140
    %1223 = vmatprep.subr.mxu0 0.0
    %1224 = vmatpush1.msra.mxu0 %v1139
    %1225 = vmatprep.subr.mxu0 0.0
    %1226 = vmatpush1.msra.mxu0 %v1138
    %1227 = vmatprep.subr.mxu0 0.0
    %1228 = vmatpush1.msra.mxu0 %v1137
    %1229 = vmatprep.subr.mxu0 0.0
    %1230 = vmatpush1.msra.mxu0 %v1136
    %1231 = vmatprep.subr.mxu0 0.0
    %1232 = vmatpush1.msra.mxu0 %v1135
    %1233 = vmatprep.subr.mxu0 0.0
    %1234 = vmatpush1.msra.mxu0 %v1134
    %1235 = vmatprep.subr.mxu0 0.0
    %1236 = vmatpush1.msra.mxu0 %v1133
    %1237 = vmatprep.subr.mxu0 0.0
    %1238 = vmatpush1.msra.mxu0 %v1132
    %1239 = vmatprep.subr.mxu0 0.0
    %1240 = vmatpush1.msra.mxu0 %v1131
    %1241 = vmatprep.subr.mxu0 0.0
    %1242 = vmatpush1.msra.mxu0 %v1130
    %1243 = vmatprep.subr.mxu0 0.0
    %1244 = vmatpush1.msra.mxu0 %v1129
    %1245 = vmatprep.subr.mxu0 0.0
    %1246 = vmatpush1.msra.mxu0 %v1128
    %1247 = vmatprep.subr.mxu0 0.0
    %1248 = vmatpush1.msra.mxu0 %v1127
    %1249 = vmatprep.subr.mxu0 0.0
    %1250 = vmatpush1.msra.mxu0 %v1126
    %1251 = vmatprep.subr.mxu0 0.0
    %1252 = vmatpush2.msra.mxu0 0.0
    %1253 = vmatprep.subr.mxu0 0.0
    %1254 = vmatpush2.msra.mxu0 0.0
    %1255 = vmatprep.subr.mxu0 0.0
    %1256 = vmatpush2.msra.mxu0 0.0
    %1257 = vmatprep.subr.mxu0 0.0
    %1258 = vmatpush2.msra.mxu0 0.0
    %1259 = vmatprep.subr.mxu0 0.0
    %1260 = vmatpush2.msra.mxu0 0.0
    %1261 = vmatprep.subr.mxu0 0.0
    %1262 = vmatpush2.msra.mxu0 0.0
    %1263 = vmatprep.subr.mxu0 0.0
    %1264 = vmatpush2.msra.mxu0 0.0
    %1265 = vmatprep.subr.mxu0 0.0
    %1266 = vmatpush2.msra.mxu0 0.0
    %1267 = vmatprep.subr.mxu0 0.0
    %1268 = vmatpush2.msra.mxu0 0.0
    %1269 = vmatprep.subr.mxu0 0.0
    %1270 = vmatpush2.msra.mxu0 0.0
    %1271 = vmatprep.subr.mxu0 0.0
    %1272 = vmatpush2.msra.mxu0 0.0
    %1273 = vmatprep.subr.mxu0 0.0
    %1274 = vmatpush2.msra.mxu0 0.0
    %1275 = vmatprep.subr.mxu0 0.0
    %1276 = vmatpush2.msra.mxu0 0.0
    %1277 = vmatprep.subr.mxu0 0.0
    %1278 = vmatpush2.msra.mxu0 0.0
    %1279 = vmatprep.subr.mxu0 0.0
    %1280 = vmatpush2.msra.mxu0 0.0
    %1281 = vmatprep.subr.mxu0 0.0
    %1282 = vmatpush2.msra.mxu0 0.0
    %1283 = vmatprep.mubr.f32.mxu0 0.0
    %1284 = vmatmul.mubr.f32.gmra.mxu0 %v1093
    %v1285 = vpop.f32.mrf.mxu0
    %v1286 = vadd.f32 %v1216, %v1285
    %v1287 = vpop.f32.mrf.mxu0
    %1288 = vdwg.mxu0
    %1289 = vst [vmem:[#allocation11] sm:$0xff] %v1286
    // Predicated region
    $region46: #{tpu_custom_call.1} parent=1 // pred_check
      _
    $region47: #{tpu_custom_call.1} parent=1 // pred_check_branch
      %1291 = sbr.rel (0) target = $region49
    $region48: #{tpu_custom_call.1} parent=1 // pred_region
      %s1293 = ssub.s32 128, 128
      %1294 = vsyncadd [#allocation4], %s1293
      %s1296 = sshll.u32 [#allocation11], 4
      %s1297 = int_to_ptr.vmem [resolvable:$true] %s1296
      %1299 = dma.vmem_to_hbm [thread:$0]  %s1297, 128, %s6, [#allocation4]
    $region49: #{tpu_custom_call.1} parent=1 // pred_fallthru
      _
    // Predicated region
    $region50: #{tpu_custom_call.1} parent=1 // pred_check
      _
    $region51: #{tpu_custom_call.1} parent=1 // pred_check_branch
      %1301 = sbr.rel (0) target = $region53
    $region52: #{tpu_custom_call.1} parent=1 // pred_region
      %1302 = dma.done [#allocation4], 128
    $region53: #{tpu_custom_call.1} parent=1 // pred_fallthru
      _
    %1303 = vsyncpa [#allocation3], 1
    %1304 = vsyncpa [#allocation6], 1
    %1305 = vsyncpa [#allocation9], 1
    %1306 = vsyncpa [#allocation4], 1

</llo_original>
